<compile_context>
chip_gen: v7x
topology: tpu7x:2x2x1
jax: 0.10.0
libtpu: 0.0.40
codegen_flags: <defaults>
</compile_context>

<pallas_src>
import numpy as np
import jax
import jax.numpy as jnp
from jax.experimental import pallas as pl
from jax.experimental.pallas import tpu as pltpu


# ----------------------------- Pallas kernel ------------------------------- #
def make_hivae_kernel(*, n_lvls, n_hidden, enc_nodes, latent, dec_hidden, off):
    E, Z, H, L = enc_nodes, latent, dec_hidden, n_lvls

    def kernel(data_ref, eps_ref, w0_ref, sp_ref, bd1_ref, wd1_hbm,
               out_ref, lat_ref, wd1_vmem, wd1_sem):
        # Kick off the decoder-weight DMA now; it is only needed after the
        # whole encoder chain, so its HBM transfer overlaps with the level
        # loop compute (wait() sits right before the decoder matmul).
        wd1_cp = pltpu.make_async_copy(wd1_hbm, wd1_vmem, wd1_sem)
        wd1_cp.start()

        data = data_ref[...]                  # (B, D) f32
        eps = eps_ref[...]                    # (B, L*Z) f32

        # zero the lane padding of the packed-latent output once
        lat_ref[...] = jnp.zeros_like(lat_ref)

        # One fused bf16 MXU pass for the dominant first-layer matmul of ALL
        # hierarchy levels: (B, D) @ (D, L*E), f32 accumulation.
        fused = jnp.dot(data.astype(jnp.bfloat16), w0_ref[...],
                        preferred_element_type=jnp.float32)

        zetas = []
        for l in range(L):
            h = fused[:, l * E:(l + 1) * E] \
                + sp_ref[off['b0'] + l: off['b0'] + l + 1, :E]
            # hierarchy(cat([data, zeta_0..zeta_{l-1}])) == data part (from the
            # fused matmul) + sum_j zeta_j @ Wz_block(l, j)  -- exact, no concat
            if l > 0:
                base = off['wz'] + Z * (l * (l - 1) // 2)
                for j in range(l):
                    h = h + jnp.dot(
                        zetas[j],
                        sp_ref[base + j * Z: base + (j + 1) * Z, :E],
                        preferred_element_type=jnp.float32)
            for k in range(n_hidden):
                idx = l * n_hidden + k
                r = off['wh'] + idx * E
                h = jnp.maximum(h, 0.0)
                h = jnp.dot(h, sp_ref[r:r + E, :E],
                            preferred_element_type=jnp.float32) \
                    + sp_ref[off['bh'] + idx: off['bh'] + idx + 1, :E]

            x_enc = jnp.maximum(h, 0.0)       # encoder.activation_fct (ReLU)

            # merged mu/logvar projection: ONE (B,E)@(E,2Z) matmul per level
            r = off['wmv'] + l * E
            mv = jnp.dot(x_enc, sp_ref[r:r + E, :2 * Z],
                         preferred_element_type=jnp.float32) \
                + sp_ref[off['bmv'] + l: off['bmv'] + l + 1, :2 * Z]
            mu = mv[:, :Z]
            logvar = mv[:, Z:2 * Z]
            zeta = mu + eps[:, l * Z:(l + 1) * Z] * jnp.exp(0.5 * logvar)
            zetas.append(zeta)

            # write latents straight into the lane-padded output (no concat)
            lat_ref[:, l * Z:(l + 1) * Z] = mu
            lat_ref[:, (L + l) * Z:(L + l + 1) * Z] = logvar
            lat_ref[:, (2 * L + l) * Z:(2 * L + l + 1) * Z] = zeta

        # decoder: Linear(zeta_concat) -> ReLU -> Linear -> Sigmoid
        # (zeta_concat @ Wd0 is computed as per-level accumulation: no concat)
        dsum = None
        for l in range(L):
            r = off['wd0'] + l * Z
            t = jnp.dot(zetas[l], sp_ref[r:r + Z, :H],
                        preferred_element_type=jnp.float32)
            dsum = t if dsum is None else dsum + t
        hd = jnp.maximum(dsum + sp_ref[off['bd0']:off['bd0'] + 1, :H], 0.0)

        wd1_cp.wait()                         # decoder weight now in VMEM
        logits = jnp.dot(hd.astype(jnp.bfloat16), wd1_vmem[...],
                         preferred_element_type=jnp.float32) + bd1_ref[...]
        out_ref[...] = jax.nn.sigmoid(logits)

    return kernel


# --------------------------- parameter creation ----------------------------- #
def _linear_init(key, fan_in, fan_out):
    """Mimics torch.nn.Linear default init: U(-1/sqrt(fan_in), 1/sqrt(fan_in))."""
    k_w, k_b = jax.random.split(key)
    bound = 1.0 / float(fan_in) ** 0.5
    w = jax.random.uniform(k_w, (fan_in, fan_out), jnp.float32, -bound, bound)
    b = jax.random.uniform(k_b, (1, fan_out), jnp.float32, -bound, bound)
    return w, b


def init_params(key, *, input_dim, n_enc_nodes, n_enc_layers, latent, n_lvls,
                dec_hidden):
    levels = []
    for l in range(n_lvls):
        key, k0, k_mu, k_var = jax.random.split(key, 4)
        kh = []
        for _ in range(n_enc_layers - 1):
            key, kk = jax.random.split(key)
            kh.append(kk)
        in_dim = input_dim + l * latent
        w0, b0 = _linear_init(k0, in_dim, n_enc_nodes)
        lvl = {
            "w0": w0, "b0": b0,
            "hidden": [_linear_init(kh[i], n_enc_nodes, n_enc_nodes)
                       for i in range(n_enc_layers - 1)],
        }
        lvl["w_mu"], lvl["b_mu"] = _linear_init(k_mu, n_enc_nodes, latent)
        lvl["w_var"], lvl["b_var"] = _linear_init(k_var, n_enc_nodes, latent)
        levels.append(lvl)

    key, k_d0, k_d1 = jax.random.split(key, 3)
    dec_w0, dec_b0 = _linear_init(k_d0, n_lvls * latent, dec_hidden)
    dec_w1, dec_b1 = _linear_init(k_d1, dec_hidden, input_dim)
    return {"levels": levels, "dec_w0": dec_w0, "dec_b0": dec_b0,
            "dec_w1": dec_w1, "dec_b1": dec_b1}


def pack_params(params, *, input_dim, n_lvls):
    """Packs logical (torch-equivalent) params into a few fused kernel inputs.

    Returns (w0_all_bf16, small_buf_f32, offsets, bd1_f32, wd1_bf16).
    """
    D = input_dim
    levels = params["levels"]
    L = n_lvls
    n_hidden = len(levels[0]["hidden"])

    # Big weights -> bf16: they are ~80% of the kernel's HBM bytes.
    w0_all = jnp.concatenate([lv["w0"][:D, :] for lv in levels],
                             axis=1).astype(jnp.bfloat16)          # (D, L*E)
    wd1 = params["dec_w1"].astype(jnp.bfloat16)                    # (H, D)
    bd1 = params["dec_b1"].astype(jnp.float32)                     # (1, D)

    # All small params packed into ONE lane-padded (rows, 128) f32 buffer:
    # one DMA instead of ~8. Each block starts on an 8-aligned row; the kernel
    # unpacks with static slices.
    names, small = [], []

    def add(name, arr):
        names.append(name)
        small.append(arr)

    add('b0', jnp.concatenate([lv["b0"] for lv in levels], axis=0))      # (L, E)
    if L > 1:
        add('wz', jnp.concatenate([lv["w0"][D:, :] for lv in levels[1:]],
                                  axis=0))                               # (Z*L(L-1)/2, E)
    if n_hidden > 0:
        add('wh', jnp.concatenate(
            [w for lv in levels for (w, _) in lv["hidden"]], axis=0))    # (L*nh*E, E)
        add('bh', jnp.concatenate(
            [b for lv in levels for (_, b) in lv["hidden"]], axis=0))    # (L*nh, E)
    add('wmv', jnp.concatenate(
        [jnp.concatenate([lv["w_mu"], lv["w_var"]], axis=1) for lv in levels],
        axis=0))                                                         # (L*E, 2Z)
    add('bmv', jnp.concatenate(
        [jnp.concatenate([lv["b_mu"], lv["b_var"]], axis=1) for lv in levels],
        axis=0))                                                         # (L, 2Z)
    add('wd0', params["dec_w0"])                                         # (L*Z, H)
    add('bd0', params["dec_b0"])                                         # (1, H)

    lanes = 128
    off, rows = {}, 0
    for n, a in zip(names, small):
        assert a.ndim == 2 and a.shape[1] <= lanes, (n, a.shape)
        off[n] = rows
        rows += -(-a.shape[0] // 8) * 8          # 8-row (sublane) alignment
    buf = jnp.zeros((rows, lanes), jnp.float32)
    for n, a in zip(names, small):
        buf = buf.at[off[n]:off[n] + a.shape[0], :a.shape[1]].set(
            a.astype(jnp.float32))
    return w0_all, buf, off, bd1, wd1


# ------------------------------- wrapper ------------------------------------ #
def hierarchical_vae_forward(x, params, eps, *, input_dim, latent, n_lvls,
                             n_enc_layers, n_enc_nodes):
    D, Z, L = input_dim, latent, n_lvls
    data = x.reshape(-1, D).astype(jnp.float32)     # torch x.view(-1, input_dim)
    B = data.shape[0]
    n_hidden = n_enc_layers - 1
    dec_hidden = params["dec_w1"].shape[0]

    w0_all, small_buf, off, bd1, wd1 = pack_params(params, input_dim=D,
                                                   n_lvls=L)

    lat_pad = -(-(3 * L * Z) // 128) * 128          # lane-dense latent output

    vmem = pl.BlockSpec(memory_space=pltpu.MemorySpace.VMEM)
    hbm = pl.BlockSpec(memory_space=pl.ANY)         # manual DMA inside kernel

    kernel = make_hivae_kernel(
        n_lvls=L, n_hidden=n_hidden, enc_nodes=n_enc_nodes, latent=Z,
        dec_hidden=dec_hidden, off=off)

    out, lat = pl.pallas_call(
        kernel,
        out_shape=(jax.ShapeDtypeStruct((B, D), jnp.float32),
                   jax.ShapeDtypeStruct((B, lat_pad), jnp.float32)),
        in_specs=[vmem, vmem, vmem, vmem, vmem, hbm],
        out_specs=(vmem, vmem),
        scratch_shapes=[pltpu.VMEM((dec_hidden, D), jnp.bfloat16),
                        pltpu.SemaphoreType.DMA],
    )(data, eps, w0_all, small_buf, bd1, wd1)

    mu_list = [lat[:, l * Z:(l + 1) * Z] for l in range(L)]
    logvar_list = [lat[:, (L + l) * Z:(L + l + 1) * Z] for l in range(L)]
    zeta_list = [lat[:, (2 * L + l) * Z:(2 * L + l + 1) * Z] for l in range(L)]
    return out, mu_list, logvar_list, zeta_list


# --------------------------- pure-JAX reference ----------------------------- #
def reference_forward(x, params, eps, *, input_dim, latent, n_lvls):
    with jax.default_matmul_precision("highest"):
        data = x.reshape(-1, input_dim).astype(jnp.float32)
        zetas, mus, lvs = [], [], []
        for l in range(n_lvls):
            lv = params["levels"][l]
            indata = jnp.concatenate([data] + zetas, axis=1)
            h = indata @ lv["w0"] + lv["b0"]
            for wk, bk in lv["hidden"]:
                h = jnp.maximum(h, 0.0) @ wk + bk
            x_enc = jnp.maximum(h, 0.0)
            mu = x_enc @ lv["w_mu"] + lv["b_mu"]
            logvar = x_enc @ lv["w_var"] + lv["b_var"]
            zeta = mu + eps[:, l * latent:(l + 1) * latent] * jnp.exp(0.5 * logvar)
            mus.append(mu); lvs.append(logvar); zetas.append(zeta)
        zc = jnp.concatenate(zetas, axis=1)
        h = jnp.maximum(zc @ params["dec_w0"] + params["dec_b0"], 0.0)
        out = jax.nn.sigmoid(h @ params["dec_w1"] + params["dec_b1"])
    return out, mus, lvs, zetas


# --------------------------------- main -------------------------------------- #
if __name__ == "__main__":
    # Input is NCHW (2, 4, 16, 16) flattened to D = 4*16*16 = 1024 per sample.
    B, C, Hs, Ws = 2, 4, 16, 16
    INPUT_DIM = C * Hs * Ws            # 1024
    LATENT = 16                        # n_latent_nodes
    N_LVLS = 2                         # n_latent_hierarchy_lvls
    N_ENC_NODES = 64                   # n_encoder_layer_nodes
    N_ENC_LAYERS = 2                   # n_encoder_layers
    DEC_HIDDEN = 64                    # decoder_hidden_nodes = [64]

    key = jax.random.PRNGKey(0)
    key, k_x, k_eps, k_par = jax.random.split(key, 4)

    x = jax.random.uniform(k_x, (B, C, Hs, Ws), jnp.float32)          # "image"
    # torch.randn_like(mu) per level, packed along lanes: (B, L*Z)
    eps = jax.random.normal(k_eps, (B, N_LVLS * LATENT), jnp.float32)
    params = init_params(
        k_par, input_dim=INPUT_DIM, n_enc_nodes=N_ENC_NODES,
        n_enc_layers=N_ENC_LAYERS, latent=LATENT, n_lvls=N_LVLS,
        dec_hidden=DEC_HIDDEN)

    out, mu_list, logvar_list, zeta_list = hierarchical_vae_forward(
        x, params, eps, input_dim=INPUT_DIM, latent=LATENT, n_lvls=N_LVLS,
        n_enc_layers=N_ENC_LAYERS, n_enc_nodes=N_ENC_NODES)
    jax.block_until_ready(out)

    # correctness check vs. f32 (highest-precision) pure-JAX reference.
    # Tolerance is relaxed vs. the previous version because the two large
    # weights are intentionally stored/used as bfloat16 in the kernel.
    ref_out, ref_mu, ref_lv, ref_z = reference_forward(
        x, params, eps, input_dim=INPUT_DIM, latent=LATENT, n_lvls=N_LVLS)
    RTOL, ATOL = 2e-2, 1e-2
    np.testing.assert_allclose(np.asarray(out), np.asarray(ref_out),
                               rtol=RTOL, atol=ATOL)
    for l in range(N_LVLS):
        np.testing.assert_allclose(np.asarray(mu_list[l]), np.asarray(ref_mu[l]),
                                   rtol=RTOL, atol=ATOL)
        np.testing.assert_allclose(np.asarray(logvar_list[l]),
                                   np.asarray(ref_lv[l]), rtol=RTOL, atol=ATOL)
        np.testing.assert_allclose(np.asarray(zeta_list[l]),
                                   np.asarray(ref_z[l]), rtol=RTOL, atol=ATOL)

    assert out.shape == (B, INPUT_DIM)
    print("KERNEL_OK")
</pallas_src>

<mosaic_0001>
module attributes {stable_mosaic.version = 11 : i64} {
  func.func @kernel(%arg0: memref<2x1024xf32, #tpu.memory_space<vmem>>, %arg1: memref<2x32xf32, #tpu.memory_space<vmem>>, %arg2: memref<1024x128xbf16, #tpu.memory_space<vmem>>, %arg3: memref<336x128xf32, #tpu.memory_space<vmem>>, %arg4: memref<1x1024xf32, #tpu.memory_space<vmem>>, %arg5: memref<64x1024xbf16, #tpu.memory_space<any>>, %arg6: memref<2x1024xf32, #tpu.memory_space<vmem>>, %arg7: memref<2x128xf32, #tpu.memory_space<vmem>>, %arg8: memref<64x1024xbf16, #tpu.memory_space<vmem>>, %arg9: memref<!tpu.dma_semaphore, #tpu.memory_space<semaphore_mem>>) attributes {dimension_semantics = [], scalar_prefetch = 0 : i64, scratch_operands = 2 : i64, tpu.core_type = #tpu.core_type<tc>} {
    tpu.enqueue_dma source(%arg5 : memref<64x1024xbf16, #tpu.memory_space<any>>) target(%arg8 : memref<64x1024xbf16, #tpu.memory_space<vmem>>) target_semaphore(%arg9 : memref<!tpu.dma_semaphore, #tpu.memory_space<semaphore_mem>>)
    %c0 = arith.constant 0 : index
    %c0_0 = arith.constant 0 : index
    %0 = vector.load %arg0[%c0, %c0_0] : memref<2x1024xf32, #tpu.memory_space<vmem>>, vector<2x1024xf32>
    %c0_1 = arith.constant 0 : index
    %c0_2 = arith.constant 0 : index
    %1 = vector.load %arg1[%c0_1, %c0_2] : memref<2x32xf32, #tpu.memory_space<vmem>>, vector<2x32xf32>
    %cst = arith.constant 0.000000e+00 : f32
    %2 = vector.broadcast %cst : f32 to vector<2x128xf32>
    %c0_3 = arith.constant 0 : index
    %c0_4 = arith.constant 0 : index
    %3 = vector.load %arg7[%c0_3, %c0_4] : memref<2x128xf32, #tpu.memory_space<vmem>>, vector<2x128xf32>
    tpu.vector_store %arg7[%c0_3, %c0_4], %2 {strides = array<i32>} : memref<2x128xf32, #tpu.memory_space<vmem>>, vector<2x128xf32>,
    %4 = arith.truncf %0 : vector<2x1024xf32> to vector<2x1024xbf16>
    %c0_5 = arith.constant 0 : index
    %c0_6 = arith.constant 0 : index
    %5 = vector.load %arg2[%c0_5, %c0_6] : memref<1024x128xbf16, #tpu.memory_space<vmem>>, vector<1024x128xbf16>
    %cst_7 = arith.constant dense<0.000000e+00> : vector<2x128xf32>
    %6 = tpu.matmul %4, %5, %cst_7 {dimension_numbers = #tpu.dot_dimension_numbers<[1], [0], [0], [1], [0, 0, 1, 1], [], []>} : vector<2x1024xbf16>, vector<1024x128xbf16>, vector<2x128xf32> -> vector<2x128xf32>
    %7 = vector.extract_strided_slice %6 {offsets = [0, 0], sizes = [2, 64], strides = [1, 1]} : vector<2x128xf32> to vector<2x64xf32>
    %c0_8 = arith.constant 0 : index
    %c0_9 = arith.constant 0 : index
    %8 = vector.load %arg3[%c0_8, %c0_9] : memref<336x128xf32, #tpu.memory_space<vmem>>, vector<1x64xf32>
    %9 = vector.broadcast %8 : vector<1x64xf32> to vector<2x64xf32>
    %10 = arith.addf %7, %9 : vector<2x64xf32>
    %cst_10 = arith.constant 0.000000e+00 : f32
    %11 = vector.broadcast %cst_10 : f32 to vector<2x64xf32>
    %12 = arith.maximumf %10, %11 : vector<2x64xf32>
    %c24 = arith.constant 24 : index
    %c0_11 = arith.constant 0 : index
    %13 = vector.load %arg3[%c24, %c0_11] : memref<336x128xf32, #tpu.memory_space<vmem>>, vector<64x64xf32>
    %cst_12 = arith.constant dense<0.000000e+00> : vector<2x64xf32>
    %14 = tpu.matmul %12, %13, %cst_12 {dimension_numbers = #tpu.dot_dimension_numbers<[1], [0], [0], [1], [0, 0, 1, 1], [], []>} : vector<2x64xf32>, vector<64x64xf32>, vector<2x64xf32> -> vector<2x64xf32>
    %c152 = arith.constant 152 : index
    %c0_13 = arith.constant 0 : index
    %15 = vector.load %arg3[%c152, %c0_13] : memref<336x128xf32, #tpu.memory_space<vmem>>, vector<1x64xf32>
    %16 = vector.broadcast %15 : vector<1x64xf32> to vector<2x64xf32>
    %17 = arith.addf %14, %16 : vector<2x64xf32>
    %cst_14 = arith.constant 0.000000e+00 : f32
    %18 = vector.broadcast %cst_14 : f32 to vector<2x64xf32>
    %19 = arith.maximumf %17, %18 : vector<2x64xf32>
    %c160 = arith.constant 160 : index
    %c0_15 = arith.constant 0 : index
    %20 = vector.load %arg3[%c160, %c0_15] : memref<336x128xf32, #tpu.memory_space<vmem>>, vector<64x32xf32>
    %cst_16 = arith.constant dense<0.000000e+00> : vector<2x32xf32>
    %21 = tpu.matmul %19, %20, %cst_16 {dimension_numbers = #tpu.dot_dimension_numbers<[1], [0], [0], [1], [0, 0, 1, 1], [], []>} : vector<2x64xf32>, vector<64x32xf32>, vector<2x32xf32> -> vector<2x32xf32>
    %c288 = arith.constant 288 : index
    %c0_17 = arith.constant 0 : index
    %22 = vector.load %arg3[%c288, %c0_17] : memref<336x128xf32, #tpu.memory_space<vmem>>, vector<1x32xf32>
    %23 = vector.broadcast %22 : vector<1x32xf32> to vector<2x32xf32>
    %24 = arith.addf %21, %23 : vector<2x32xf32>
    %25 = vector.extract_strided_slice %24 {offsets = [0, 0], sizes = [2, 16], strides = [1, 1]} : vector<2x32xf32> to vector<2x16xf32>
    %26 = vector.extract_strided_slice %24 {offsets = [0, 16], sizes = [2, 16], strides = [1, 1]} : vector<2x32xf32> to vector<2x16xf32>
    %27 = vector.extract_strided_slice %1 {offsets = [0, 0], sizes = [2, 16], strides = [1, 1]} : vector<2x32xf32> to vector<2x16xf32>
    %cst_18 = arith.constant 5.000000e-01 : f32
    %28 = vector.broadcast %cst_18 : f32 to vector<2x16xf32>
    %29 = arith.mulf %28, %26 : vector<2x16xf32>
    %30 = math.exp %29 : vector<2x16xf32>
    %31 = arith.mulf %27, %30 : vector<2x16xf32>
    %32 = arith.addf %25, %31 : vector<2x16xf32>
    %c0_19 = arith.constant 0 : index
    %c0_20 = arith.constant 0 : index
    %33 = vector.load %arg7[%c0_19, %c0_20] : memref<2x128xf32, #tpu.memory_space<vmem>>, vector<2x16xf32>
    tpu.vector_store %arg7[%c0_19, %c0_20], %25 {strides = array<i32>} : memref<2x128xf32, #tpu.memory_space<vmem>>, vector<2x16xf32>,
    %c0_21 = arith.constant 0 : index
    %c32 = arith.constant 32 : index
    %34 = vector.load %arg7[%c0_21, %c32] : memref<2x128xf32, #tpu.memory_space<vmem>>, vector<2x16xf32>
    tpu.vector_store %arg7[%c0_21, %c32], %26 {strides = array<i32>} : memref<2x128xf32, #tpu.memory_space<vmem>>, vector<2x16xf32>,
    %c0_22 = arith.constant 0 : index
    %c64 = arith.constant 64 : index
    %35 = vector.load %arg7[%c0_22, %c64] : memref<2x128xf32, #tpu.memory_space<vmem>>, vector<2x16xf32>
    tpu.vector_store %arg7[%c0_22, %c64], %32 {strides = array<i32>} : memref<2x128xf32, #tpu.memory_space<vmem>>, vector<2x16xf32>,
    %36 = vector.extract_strided_slice %6 {offsets = [0, 64], sizes = [2, 64], strides = [1, 1]} : vector<2x128xf32> to vector<2x64xf32>
    %c1 = arith.constant 1 : index
    %c0_23 = arith.constant 0 : index
    %37 = vector.load %arg3[%c1, %c0_23] : memref<336x128xf32, #tpu.memory_space<vmem>>, vector<1x64xf32>
    %38 = vector.broadcast %37 : vector<1x64xf32> to vector<2x64xf32>
    %39 = arith.addf %36, %38 : vector<2x64xf32>
    %c8 = arith.constant 8 : index
    %c0_24 = arith.constant 0 : index
    %40 = vector.load %arg3[%c8, %c0_24] : memref<336x128xf32, #tpu.memory_space<vmem>>, vector<16x64xf32>
    %cst_25 = arith.constant dense<0.000000e+00> : vector<2x64xf32>
    %41 = tpu.matmul %32, %40, %cst_25 {dimension_numbers = #tpu.dot_dimension_numbers<[1], [0], [0], [1], [0, 0, 1, 1], [], []>} : vector<2x16xf32>, vector<16x64xf32>, vector<2x64xf32> -> vector<2x64xf32>
    %42 = arith.addf %39, %41 : vector<2x64xf32>
    %cst_26 = arith.constant 0.000000e+00 : f32
    %43 = vector.broadcast %cst_26 : f32 to vector<2x64xf32>
    %44 = arith.maximumf %42, %43 : vector<2x64xf32>
    %c88 = arith.constant 88 : index
    %c0_27 = arith.constant 0 : index
    %45 = vector.load %arg3[%c88, %c0_27] : memref<336x128xf32, #tpu.memory_space<vmem>>, vector<64x64xf32>
    %cst_28 = arith.constant dense<0.000000e+00> : vector<2x64xf32>
    %46 = tpu.matmul %44, %45, %cst_28 {dimension_numbers = #tpu.dot_dimension_numbers<[1], [0], [0], [1], [0, 0, 1, 1], [], []>} : vector<2x64xf32>, vector<64x64xf32>, vector<2x64xf32> -> vector<2x64xf32>
    %c153 = arith.constant 153 : index
    %c0_29 = arith.constant 0 : index
    %47 = vector.load %arg3[%c153, %c0_29] : memref<336x128xf32, #tpu.memory_space<vmem>>, vector<1x64xf32>
    %48 = vector.broadcast %47 : vector<1x64xf32> to vector<2x64xf32>
    %49 = arith.addf %46, %48 : vector<2x64xf32>
    %cst_30 = arith.constant 0.000000e+00 : f32
    %50 = vector.broadcast %cst_30 : f32 to vector<2x64xf32>
    %51 = arith.maximumf %49, %50 : vector<2x64xf32>
    %c224 = arith.constant 224 : index
    %c0_31 = arith.constant 0 : index
    %52 = vector.load %arg3[%c224, %c0_31] : memref<336x128xf32, #tpu.memory_space<vmem>>, vector<64x32xf32>
    %cst_32 = arith.constant dense<0.000000e+00> : vector<2x32xf32>
    %53 = tpu.matmul %51, %52, %cst_32 {dimension_numbers = #tpu.dot_dimension_numbers<[1], [0], [0], [1], [0, 0, 1, 1], [], []>} : vector<2x64xf32>, vector<64x32xf32>, vector<2x32xf32> -> vector<2x32xf32>
    %c289 = arith.constant 289 : index
    %c0_33 = arith.constant 0 : index
    %54 = vector.load %arg3[%c289, %c0_33] : memref<336x128xf32, #tpu.memory_space<vmem>>, vector<1x32xf32>
    %55 = vector.broadcast %54 : vector<1x32xf32> to vector<2x32xf32>
    %56 = arith.addf %53, %55 : vector<2x32xf32>
    %57 = vector.extract_strided_slice %56 {offsets = [0, 0], sizes = [2, 16], strides = [1, 1]} : vector<2x32xf32> to vector<2x16xf32>
    %58 = vector.extract_strided_slice %56 {offsets = [0, 16], sizes = [2, 16], strides = [1, 1]} : vector<2x32xf32> to vector<2x16xf32>
    %59 = vector.extract_strided_slice %1 {offsets = [0, 16], sizes = [2, 16], strides = [1, 1]} : vector<2x32xf32> to vector<2x16xf32>
    %cst_34 = arith.constant 5.000000e-01 : f32
    %60 = vector.broadcast %cst_34 : f32 to vector<2x16xf32>
    %61 = arith.mulf %60, %58 : vector<2x16xf32>
    %62 = math.exp %61 : vector<2x16xf32>
    %63 = arith.mulf %59, %62 : vector<2x16xf32>
    %64 = arith.addf %57, %63 : vector<2x16xf32>
    %c0_35 = arith.constant 0 : index
    %c16 = arith.constant 16 : index
    %65 = vector.load %arg7[%c0_35, %c16] : memref<2x128xf32, #tpu.memory_space<vmem>>, vector<2x16xf32>
    tpu.vector_store %arg7[%c0_35, %c16], %57 {strides = array<i32>} : memref<2x128xf32, #tpu.memory_space<vmem>>, vector<2x16xf32>,
    %c0_36 = arith.constant 0 : index
    %c48 = arith.constant 48 : index
    %66 = vector.load %arg7[%c0_36, %c48] : memref<2x128xf32, #tpu.memory_space<vmem>>, vector<2x16xf32>
    tpu.vector_store %arg7[%c0_36, %c48], %58 {strides = array<i32>} : memref<2x128xf32, #tpu.memory_space<vmem>>, vector<2x16xf32>,
    %c0_37 = arith.constant 0 : index
    %c80 = arith.constant 80 : index
    %67 = vector.load %arg7[%c0_37, %c80] : memref<2x128xf32, #tpu.memory_space<vmem>>, vector<2x16xf32>
    tpu.vector_store %arg7[%c0_37, %c80], %64 {strides = array<i32>} : memref<2x128xf32, #tpu.memory_space<vmem>>, vector<2x16xf32>,
    %c296 = arith.constant 296 : index
    %c0_38 = arith.constant 0 : index
    %68 = vector.load %arg3[%c296, %c0_38] : memref<336x128xf32, #tpu.memory_space<vmem>>, vector<16x64xf32>
    %cst_39 = arith.constant dense<0.000000e+00> : vector<2x64xf32>
    %69 = tpu.matmul %32, %68, %cst_39 {dimension_numbers = #tpu.dot_dimension_numbers<[1], [0], [0], [1], [0, 0, 1, 1], [], []>} : vector<2x16xf32>, vector<16x64xf32>, vector<2x64xf32> -> vector<2x64xf32>
    %c312 = arith.constant 312 : index
    %c0_40 = arith.constant 0 : index
    %70 = vector.load %arg3[%c312, %c0_40] : memref<336x128xf32, #tpu.memory_space<vmem>>, vector<16x64xf32>
    %cst_41 = arith.constant dense<0.000000e+00> : vector<2x64xf32>
    %71 = tpu.matmul %64, %70, %cst_41 {dimension_numbers = #tpu.dot_dimension_numbers<[1], [0], [0], [1], [0, 0, 1, 1], [], []>} : vector<2x16xf32>, vector<16x64xf32>, vector<2x64xf32> -> vector<2x64xf32>
    %72 = arith.addf %69, %71 : vector<2x64xf32>
    %c328 = arith.constant 328 : index
    %c0_42 = arith.constant 0 : index
    %73 = vector.load %arg3[%c328, %c0_42] : memref<336x128xf32, #tpu.memory_space<vmem>>, vector<1x64xf32>
    %74 = vector.broadcast %73 : vector<1x64xf32> to vector<2x64xf32>
    %75 = arith.addf %72, %74 : vector<2x64xf32>
    %cst_43 = arith.constant 0.000000e+00 : f32
    %76 = vector.broadcast %cst_43 : f32 to vector<2x64xf32>
    %77 = arith.maximumf %75, %76 : vector<2x64xf32>
    tpu.wait_dma2 semaphore(%arg9 : memref<!tpu.dma_semaphore, #tpu.memory_space<semaphore_mem>>) src(%arg5 : memref<64x1024xbf16, #tpu.memory_space<any>>) dst(%arg8 : memref<64x1024xbf16, #tpu.memory_space<vmem>>)
    %78 = arith.truncf %77 : vector<2x64xf32> to vector<2x64xbf16>
    %c0_44 = arith.constant 0 : index
    %c0_45 = arith.constant 0 : index
    %79 = vector.load %arg8[%c0_44, %c0_45] : memref<64x1024xbf16, #tpu.memory_space<vmem>>, vector<64x1024xbf16>
    %cst_46 = arith.constant dense<0.000000e+00> : vector<2x1024xf32>
    %80 = tpu.matmul %78, %79, %cst_46 {dimension_numbers = #tpu.dot_dimension_numbers<[1], [0], [0], [1], [0, 0, 1, 1], [], []>} : vector<2x64xbf16>, vector<64x1024xbf16>, vector<2x1024xf32> -> vector<2x1024xf32>
    %c0_47 = arith.constant 0 : index
    %c0_48 = arith.constant 0 : index
    %81 = vector.load %arg4[%c0_47, %c0_48] : memref<1x1024xf32, #tpu.memory_space<vmem>>, vector<1x1024xf32>
    %82 = vector.broadcast %81 : vector<1x1024xf32> to vector<2x1024xf32>
    %83 = arith.addf %80, %82 : vector<2x1024xf32>
    %84 = arith.negf %83 : vector<2x1024xf32>
    %85 = math.exp %84 : vector<2x1024xf32>
    %cst_49 = arith.constant 1.000000e+00 : f32
    %86 = vector.broadcast %cst_49 : f32 to vector<2x1024xf32>
    %87 = arith.addf %86, %85 : vector<2x1024xf32>
    %88 = arith.divf %86, %87 : vector<2x1024xf32>
    %c0_50 = arith.constant 0 : index
    %c0_51 = arith.constant 0 : index
    %89 = vector.load %arg6[%c0_50, %c0_51] : memref<2x1024xf32, #tpu.memory_space<vmem>>, vector<2x1024xf32>
    tpu.vector_store %arg6[%c0_50, %c0_51], %88 {strides = array<i32>} : memref<2x1024xf32, #tpu.memory_space<vmem>>, vector<2x1024xf32>,
    return
  }
}

</mosaic_0001>

<llo_original>
// kernel: tpu_custom_call.1
$region0: #{tpu_custom_call.1}
  #allocation0 [shape = 'u32[]', space=smem, size = 0x4, offset = 0x4, fixed_abs, tag = 'smem constant byte address 0x4 - core index']
  #allocation1 [shape = 'u32[144,128]{1,0:T(1,128)}', space=vmem, size = 0x12000, scoped, tag = 'internal scratch']
  #allocation2 [shape = 'bf16[64,1024]{1,0:T(16,128)(2,1)}', space=vmem, size = 0x20000, scoped, tag = 'scratch operand']
  #allocation3 [shape = 's32[1]{0}', space=sflag, size = 0x4, scoped, tag = 'scratch operand']
  #allocation13 [shape = 's32[]', space=sflag, size = 0x4, offset = 0, fixed_abs, tag = 'sflag constant byte address 0x0 - dummy sync flag']
  %s0 = inlined_call_operand.hbm [shape: f32[2,1024], index: 0, kind: input, shape index: {}]
  %s1 = inlined_call_operand.vmem [shape: f32[2,32], index: 1, kind: input, shape index: {}]
  %s2 = inlined_call_operand.hbm [shape: bf16[1024,128], index: 2, kind: input, shape index: {}]
  %s3 = inlined_call_operand.hbm [shape: f32[336,128], index: 3, kind: input, shape index: {}]
  %s4 = inlined_call_operand.vmem [shape: f32[1,1024], index: 4, kind: input, shape index: {}]
  %s5 = inlined_call_operand.hbm [shape: bf16[64,1024], index: 5, kind: input, shape index: {}]
  %s6 = inlined_call_operand.hbm [shape: f32[2,1024], index: 6, kind: output, shape index: {0}]
  %s7 = inlined_call_operand.hbm [shape: f32[2,128], index: 7, kind: output, shape index: {1}]
  %8 = xla_tuple %s6, %s7
  %s9 = sld [smem:[#allocation0]]
  $region50: #{tpu_custom_call.1} parent=0
    _
  %s11 = ssub.s32 1, %s9
  %s12 = scalar_select 0, %s11, %s9
  $region1: #{tpu_custom_call.1} parent=0
    #allocation4 [shape = 'u8[8192]{0}', space=vmem, size = 0x2000, scoped, tag = 'input window, operand 0, single buffered']
    #allocation5 [shape = 's32[1]{0}', space=sflag, size = 0x4, scoped, tag = 'scoped memory for tpu_custom_call.1']
    #allocation6 [shape = 's32[1]{0}', space=sflag, size = 0x4, scoped, tag = 'scoped memory for tpu_custom_call.1']
    #allocation7 [shape = 'u8[262144]{0}', space=vmem, size = 0x40000, scoped, tag = 'input window, operand 2, single buffered']
    #allocation8 [shape = 's32[1]{0}', space=sflag, size = 0x4, scoped, tag = 'scoped memory for tpu_custom_call.1']
    #allocation9 [shape = 'u8[172032]{0}', space=vmem, size = 0x2a000, scoped, tag = 'input window, operand 3, single buffered']
    #allocation10 [shape = 'u8[8192]{0}', space=vmem, size = 0x2000, scoped, tag = 'output window, operand 0, single buffered']
    #allocation11 [shape = 'u8[1024]{0}', space=vmem, size = 0x400, scoped, tag = 'output window, operand 1, single buffered']
    #allocation12 [shape = 's32[1]{0}', space=sflag, size = 0x4, scoped, tag = 'scoped memory for tpu_custom_call.1']
    #allocation14 [shape = 'u32[9]{0}', space=smem, size = 0x24, scoped, tag = 'DMA stride descriptor']
    %13 = vsyncpa [#allocation5], 0
    %14 = vsyncpa [#allocation8], 0
    %15 = vsyncpa [#allocation6], 0
    %16 = vsyncpa [#allocation12], 0
    // Predicated region
    $region2: #{tpu_custom_call.1} parent=1 // pred_check
      _
    $region3: #{tpu_custom_call.1} parent=1 // pred_check_branch
      %18 = sbr.rel (0) target = $region5
    $region4: #{tpu_custom_call.1} parent=1 // pred_region
      %s20 = ssub.s32 256, 256
      %21 = vsyncadd [#allocation5], %s20
      %s23 = sshll.u32 [#allocation4], 4
      %s24 = int_to_ptr.vmem [resolvable:$true] %s23
      %26 = dma.hbm_to_vmem [thread:$0]  %s0, 256, %s24, [#allocation5]
    $region5: #{tpu_custom_call.1} parent=1 // pred_fallthru
      _
    // Predicated region
    $region6: #{tpu_custom_call.1} parent=1 // pred_check
      _
    $region7: #{tpu_custom_call.1} parent=1 // pred_check_branch
      %28 = sbr.rel (0) target = $region9
    $region8: #{tpu_custom_call.1} parent=1 // pred_region
      _
    $region9: #{tpu_custom_call.1} parent=1 // pred_fallthru
      _
    // Predicated region
    $region10: #{tpu_custom_call.1} parent=1 // pred_check
      _
    $region11: #{tpu_custom_call.1} parent=1 // pred_check_branch
      %30 = sbr.rel (0) target = $region13
    $region12: #{tpu_custom_call.1} parent=1 // pred_region
      %s32 = ssub.s32 8192, 8192
      %33 = vsyncadd [#allocation8], %s32
      %s34 = sshll.u32 [#allocation7], 4
      %s35 = int_to_ptr.vmem [resolvable:$true] %s34
      %40 = dma.hbm_to_vmem [thread:$0]  %s2, 8192, %s35, [#allocation8], 64, 64, 4
    $region13: #{tpu_custom_call.1} parent=1 // pred_fallthru
      _
    // Predicated region
    $region14: #{tpu_custom_call.1} parent=1 // pred_check
      _
    $region15: #{tpu_custom_call.1} parent=1 // pred_check_branch
      %42 = sbr.rel (0) target = $region17
    $region16: #{tpu_custom_call.1} parent=1 // pred_region
      %s44 = ssub.s32 5376, 5376
      %45 = vsyncadd [#allocation8], %s44
      %s46 = sshll.u32 [#allocation9], 4
      %s47 = int_to_ptr.vmem [resolvable:$true] %s46
      %52 = dma.hbm_to_vmem [thread:$0]  %s3, 5376, %s47, [#allocation8], 128, 128, 8
    $region17: #{tpu_custom_call.1} parent=1 // pred_fallthru
      _
    // Predicated region
    $region18: #{tpu_custom_call.1} parent=1 // pred_check
      _
    $region19: #{tpu_custom_call.1} parent=1 // pred_check_branch
      %54 = sbr.rel (0) target = $region21
    $region20: #{tpu_custom_call.1} parent=1 // pred_region
      _
    $region21: #{tpu_custom_call.1} parent=1 // pred_fallthru
      _
    // Predicated region
    $region22: #{tpu_custom_call.1} parent=1 // pred_check
      _
    $region23: #{tpu_custom_call.1} parent=1 // pred_check_branch
      %56 = sbr.rel (0) target = $region25
    $region24: #{tpu_custom_call.1} parent=1 // pred_region
      %57 = dma.done [#allocation5], 256
    $region25: #{tpu_custom_call.1} parent=1 // pred_fallthru
      _
    // Predicated region
    $region26: #{tpu_custom_call.1} parent=1 // pred_check
      _
    $region27: #{tpu_custom_call.1} parent=1 // pred_check_branch
      %59 = sbr.rel (0) target = $region29
    $region28: #{tpu_custom_call.1} parent=1 // pred_region
      %60 = dma.done [#allocation8], 8192
    $region29: #{tpu_custom_call.1} parent=1 // pred_fallthru
      _
    // Predicated region
    $region30: #{tpu_custom_call.1} parent=1 // pred_check
      _
    $region31: #{tpu_custom_call.1} parent=1 // pred_check_branch
      %62 = sbr.rel (0) target = $region33
    $region32: #{tpu_custom_call.1} parent=1 // pred_region
      %63 = dma.done [#allocation8], 5376
    $region33: #{tpu_custom_call.1} parent=1 // pred_fallthru
      _
    %s66 = sshll.u32 1, 14
    %s67 = sxor.u32 4294967295, %s66
    %s69 = sld [smem:[#allocation0]]
    %s70 = sadd.s32 2, %s69
    %s72 = sshll.u32 7, 26
    %s73 = sxor.u32 4294967295, %s72
    %s74 = sand.u32 0, %s73
    %s75 = sshll.u32 %s70, 26
    %s76 = sor.u32 %s74, %s75
    %s77 = sshll.u32 [#allocation2], 4
    %s78 = int_to_ptr.vmem [resolvable:$true] %s77
    %81 = sst [smem:[#allocation14]] 1024
    %s82 = scalar_lea.smem [#allocation14], 1
    %83 = sst [smem:[%s82]] 1024
    %s84 = scalar_lea.smem [#allocation14], 2
    %85 = sst [smem:[%s84]] 8
    %s86 = scalar_lea.smem [#allocation14], 3
    %87 = sst [smem:[%s86]] 64
    %s88 = scalar_lea.smem [#allocation14], 4
    %89 = sst [smem:[%s88]] 128
    %s90 = scalar_lea.smem [#allocation14], 5
    %91 = sst [smem:[%s90]] 2
    %s92 = scalar_lea.smem [#allocation14], 6
    %93 = sst [smem:[%s92]] 512
    %s94 = scalar_lea.smem [#allocation14], 7
    %95 = sst [smem:[%s94]] 64
    %s96 = scalar_lea.smem [#allocation14], 8
    %97 = sst [smem:[%s96]] 4
    %99 = dma.general %s5, 4096, %s78, [#allocation3], [#allocation13], [#allocation14], %s76, 0
    %v100 = vld [vmem:[#allocation4] sm:$0xff]
    %v101 = vld [vmem:[#allocation4 + $0x8] sm:$0xff]
    %v102 = vld [vmem:[%s1] sm:$0x3]
    %103 = vst [vmem:[#allocation11] sm:$0x3] 0.0
    %v106 = vcombine.high %v100, %v100
    %v108 = vunpack.c.l.s4 1983009808
    %v109 = vunpack.c.0.s8 %v108
    %v110 = vlaneseq
    %v111 = vshrl.u32 %v110, 7
    %v112 = vsub.s32 %v109, %v111
    %v113 = vrot.slane %v100, %v112
    %v115 = vunpack.c.l.s4 1983009808
    %v116 = vunpack.c.0.s8 %v115
    %v117 = vlaneseq
    %v118 = vshrl.u32 %v117, 7
    %v119 = vsub.s32 %v116, %v118
    %v120 = vrot.slane %v106, %v119
    %v121 = vcombine.high %v113, %v113
    %v122 = vcombine.high %v120, %v120
    %v123 = vcombine.high %v101, %v101
    %v125 = vunpack.c.l.s4 1983009808
    %v126 = vunpack.c.0.s8 %v125
    %v127 = vlaneseq
    %v128 = vshrl.u32 %v127, 7
    %v129 = vsub.s32 %v126, %v128
    %v130 = vrot.slane %v101, %v129
    %v132 = vunpack.c.l.s4 1983009808
    %v133 = vunpack.c.0.s8 %v132
    %v134 = vlaneseq
    %v135 = vshrl.u32 %v134, 7
    %v136 = vsub.s32 %v133, %v135
    %v137 = vrot.slane %v123, %v136
    %v138 = vcombine.high %v130, %v130
    %v139 = vcombine.high %v137, %v137
    %v148 = vpack.c.bf16 %v113, %v113
    %v149 = vpack.c.bf16 %v121, %v121
    %v150 = vpack.c.bf16 %v120, %v120
    %v151 = vpack.c.bf16 %v122, %v122
    %v152 = vpack.c.bf16 %v130, %v130
    %v153 = vpack.c.bf16 %v138, %v138
    %v154 = vpack.c.bf16 %v137, %v137
    %v155 = vpack.c.bf16 %v139, %v139
    %v156 = vld [vmem:[#allocation7] sm:$0xf]
    %v157 = vld [vmem:[#allocation7 + $0x4] sm:$0xf]
    %v158 = vld [vmem:[#allocation7 + $0x8] sm:$0xf]
    %v159 = vld [vmem:[#allocation7 + $0xc] sm:$0xf]
    %v160 = vld [vmem:[#allocation7 + $0x10] sm:$0xf]
    %v161 = vld [vmem:[#allocation7 + $0x14] sm:$0xf]
    %v162 = vld [vmem:[#allocation7 + $0x18] sm:$0xf]
    %v163 = vld [vmem:[#allocation7 + $0x1c] sm:$0xf]
    %v164 = vld [vmem:[#allocation7 + $0x20] sm:$0xf]
    %v165 = vld [vmem:[#allocation7 + $0x24] sm:$0xf]
    %v166 = vld [vmem:[#allocation7 + $0x28] sm:$0xf]
    %v167 = vld [vmem:[#allocation7 + $0x2c] sm:$0xf]
    %v168 = vld [vmem:[#allocation7 + $0x30] sm:$0xf]
    %v169 = vld [vmem:[#allocation7 + $0x34] sm:$0xf]
    %v170 = vld [vmem:[#allocation7 + $0x38] sm:$0xf]
    %v171 = vld [vmem:[#allocation7 + $0x3c] sm:$0xf]
    %v172 = vld [vmem:[#allocation7 + $0x40] sm:$0xf]
    %v173 = vld [vmem:[#allocation7 + $0x44] sm:$0xf]
    %v174 = vld [vmem:[#allocation7 + $0x48] sm:$0xf]
    %v175 = vld [vmem:[#allocation7 + $0x4c] sm:$0xf]
    %v176 = vld [vmem:[#allocation7 + $0x50] sm:$0xf]
    %v177 = vld [vmem:[#allocation7 + $0x54] sm:$0xf]
    %v178 = vld [vmem:[#allocation7 + $0x58] sm:$0xf]
    %v179 = vld [vmem:[#allocation7 + $0x5c] sm:$0xf]
    %v180 = vld [vmem:[#allocation7 + $0x60] sm:$0xf]
    %v181 = vld [vmem:[#allocation7 + $0x64] sm:$0xf]
    %v182 = vld [vmem:[#allocation7 + $0x68] sm:$0xf]
    %v183 = vld [vmem:[#allocation7 + $0x6c] sm:$0xf]
    %v184 = vld [vmem:[#allocation7 + $0x70] sm:$0xf]
    %v185 = vld [vmem:[#allocation7 + $0x74] sm:$0xf]
    %v186 = vld [vmem:[#allocation7 + $0x78] sm:$0xf]
    %v187 = vld [vmem:[#allocation7 + $0x7c] sm:$0xf]
    %v188 = vld [vmem:[#allocation7 + $0x80] sm:$0xf]
    %v189 = vld [vmem:[#allocation7 + $0x84] sm:$0xf]
    %v190 = vld [vmem:[#allocation7 + $0x88] sm:$0xf]
    %v191 = vld [vmem:[#allocation7 + $0x8c] sm:$0xf]
    %v192 = vld [vmem:[#allocation7 + $0x90] sm:$0xf]
    %v193 = vld [vmem:[#allocation7 + $0x94] sm:$0xf]
    %v194 = vld [vmem:[#allocation7 + $0x98] sm:$0xf]
    %v195 = vld [vmem:[#allocation7 + $0x9c] sm:$0xf]
    %v196 = vld [vmem:[#allocation7 + $0xa0] sm:$0xf]
    %v197 = vld [vmem:[#allocation7 + $0xa4] sm:$0xf]
    %v198 = vld [vmem:[#allocation7 + $0xa8] sm:$0xf]
    %v199 = vld [vmem:[#allocation7 + $0xac] sm:$0xf]
    %v200 = vld [vmem:[#allocation7 + $0xb0] sm:$0xf]
    %v201 = vld [vmem:[#allocation7 + $0xb4] sm:$0xf]
    %v202 = vld [vmem:[#allocation7 + $0xb8] sm:$0xf]
    %v203 = vld [vmem:[#allocation7 + $0xbc] sm:$0xf]
    %v204 = vld [vmem:[#allocation7 + $0xc0] sm:$0xf]
    %v205 = vld [vmem:[#allocation7 + $0xc4] sm:$0xf]
    %v206 = vld [vmem:[#allocation7 + $0xc8] sm:$0xf]
    %v207 = vld [vmem:[#allocation7 + $0xcc] sm:$0xf]
    %v208 = vld [vmem:[#allocation7 + $0xd0] sm:$0xf]
    %v209 = vld [vmem:[#allocation7 + $0xd4] sm:$0xf]
    %v210 = vld [vmem:[#allocation7 + $0xd8] sm:$0xf]
    %v211 = vld [vmem:[#allocation7 + $0xdc] sm:$0xf]
    %v212 = vld [vmem:[#allocation7 + $0xe0] sm:$0xf]
    %v213 = vld [vmem:[#allocation7 + $0xe4] sm:$0xf]
    %v214 = vld [vmem:[#allocation7 + $0xe8] sm:$0xf]
    %v215 = vld [vmem:[#allocation7 + $0xec] sm:$0xf]
    %v216 = vld [vmem:[#allocation7 + $0xf0] sm:$0xf]
    %v217 = vld [vmem:[#allocation7 + $0xf4] sm:$0xf]
    %v218 = vld [vmem:[#allocation7 + $0xf8] sm:$0xf]
    %v219 = vld [vmem:[#allocation7 + $0xfc] sm:$0xf]
    %v220 = vld [vmem:[#allocation7 + $0x100] sm:$0xf]
    %v221 = vld [vmem:[#allocation7 + $0x104] sm:$0xf]
    %v222 = vld [vmem:[#allocation7 + $0x108] sm:$0xf]
    %v223 = vld [vmem:[#allocation7 + $0x10c] sm:$0xf]
    %v224 = vld [vmem:[#allocation7 + $0x110] sm:$0xf]
    %v225 = vld [vmem:[#allocation7 + $0x114] sm:$0xf]
    %v226 = vld [vmem:[#allocation7 + $0x118] sm:$0xf]
    %v227 = vld [vmem:[#allocation7 + $0x11c] sm:$0xf]
    %v228 = vld [vmem:[#allocation7 + $0x120] sm:$0xf]
    %v229 = vld [vmem:[#allocation7 + $0x124] sm:$0xf]
    %v230 = vld [vmem:[#allocation7 + $0x128] sm:$0xf]
    %v231 = vld [vmem:[#allocation7 + $0x12c] sm:$0xf]
    %v232 = vld [vmem:[#allocation7 + $0x130] sm:$0xf]
    %v233 = vld [vmem:[#allocation7 + $0x134] sm:$0xf]
    %v234 = vld [vmem:[#allocation7 + $0x138] sm:$0xf]
    %v235 = vld [vmem:[#allocation7 + $0x13c] sm:$0xf]
    %v236 = vld [vmem:[#allocation7 + $0x140] sm:$0xf]
    %v237 = vld [vmem:[#allocation7 + $0x144] sm:$0xf]
    %v238 = vld [vmem:[#allocation7 + $0x148] sm:$0xf]
    %v239 = vld [vmem:[#allocation7 + $0x14c] sm:$0xf]
    %v240 = vld [vmem:[#allocation7 + $0x150] sm:$0xf]
    %v241 = vld [vmem:[#allocation7 + $0x154] sm:$0xf]
    %v242 = vld [vmem:[#allocation7 + $0x158] sm:$0xf]
    %v243 = vld [vmem:[#allocation7 + $0x15c] sm:$0xf]
    %v244 = vld [vmem:[#allocation7 + $0x160] sm:$0xf]
    %v245 = vld [vmem:[#allocation7 + $0x164] sm:$0xf]
    %v246 = vld [vmem:[#allocation7 + $0x168] sm:$0xf]
    %v247 = vld [vmem:[#allocation7 + $0x16c] sm:$0xf]
    %v248 = vld [vmem:[#allocation7 + $0x170] sm:$0xf]
    %v249 = vld [vmem:[#allocation7 + $0x174] sm:$0xf]
    %v250 = vld [vmem:[#allocation7 + $0x178] sm:$0xf]
    %v251 = vld [vmem:[#allocation7 + $0x17c] sm:$0xf]
    %v252 = vld [vmem:[#allocation7 + $0x180] sm:$0xf]
    %v253 = vld [vmem:[#allocation7 + $0x184] sm:$0xf]
    %v254 = vld [vmem:[#allocation7 + $0x188] sm:$0xf]
    %v255 = vld [vmem:[#allocation7 + $0x18c] sm:$0xf]
    %v256 = vld [vmem:[#allocation7 + $0x190] sm:$0xf]
    %v257 = vld [vmem:[#allocation7 + $0x194] sm:$0xf]
    %v258 = vld [vmem:[#allocation7 + $0x198] sm:$0xf]
    %v259 = vld [vmem:[#allocation7 + $0x19c] sm:$0xf]
    %v260 = vld [vmem:[#allocation7 + $0x1a0] sm:$0xf]
    %v261 = vld [vmem:[#allocation7 + $0x1a4] sm:$0xf]
    %v262 = vld [vmem:[#allocation7 + $0x1a8] sm:$0xf]
    %v263 = vld [vmem:[#allocation7 + $0x1ac] sm:$0xf]
    %v264 = vld [vmem:[#allocation7 + $0x1b0] sm:$0xf]
    %v265 = vld [vmem:[#allocation7 + $0x1b4] sm:$0xf]
    %v266 = vld [vmem:[#allocation7 + $0x1b8] sm:$0xf]
    %v267 = vld [vmem:[#allocation7 + $0x1bc] sm:$0xf]
    %v268 = vld [vmem:[#allocation7 + $0x1c0] sm:$0xf]
    %v269 = vld [vmem:[#allocation7 + $0x1c4] sm:$0xf]
    %v270 = vld [vmem:[#allocation7 + $0x1c8] sm:$0xf]
    %v271 = vld [vmem:[#allocation7 + $0x1cc] sm:$0xf]
    %v272 = vld [vmem:[#allocation7 + $0x1d0] sm:$0xf]
    %v273 = vld [vmem:[#allocation7 + $0x1d4] sm:$0xf]
    %v274 = vld [vmem:[#allocation7 + $0x1d8] sm:$0xf]
    %v275 = vld [vmem:[#allocation7 + $0x1dc] sm:$0xf]
    %v276 = vld [vmem:[#allocation7 + $0x1e0] sm:$0xf]
    %v277 = vld [vmem:[#allocation7 + $0x1e4] sm:$0xf]
    %v278 = vld [vmem:[#allocation7 + $0x1e8] sm:$0xf]
    %v279 = vld [vmem:[#allocation7 + $0x1ec] sm:$0xf]
    %v280 = vld [vmem:[#allocation7 + $0x1f0] sm:$0xf]
    %v281 = vld [vmem:[#allocation7 + $0x1f4] sm:$0xf]
    %v282 = vld [vmem:[#allocation7 + $0x1f8] sm:$0xf]
    %v283 = vld [vmem:[#allocation7 + $0x1fc] sm:$0xf]
    %v412 = vunpack.c.l.b16 %v156
    %v413 = vunpack.c.l.b16 %v157
    %v414 = vunpack.c.l.b16 %v158
    %v415 = vunpack.c.l.b16 %v159
    %v416 = vunpack.c.l.b16 %v160
    %v417 = vunpack.c.l.b16 %v161
    %v418 = vunpack.c.l.b16 %v162
    %v419 = vunpack.c.l.b16 %v163
    %v420 = vunpack.c.l.b16 %v164
    %v421 = vunpack.c.l.b16 %v165
    %v422 = vunpack.c.l.b16 %v166
    %v423 = vunpack.c.l.b16 %v167
    %v424 = vunpack.c.l.b16 %v168
    %v425 = vunpack.c.l.b16 %v169
    %v426 = vunpack.c.l.b16 %v170
    %v427 = vunpack.c.l.b16 %v171
    %v428 = vunpack.c.l.b16 %v172
    %v429 = vunpack.c.l.b16 %v173
    %v430 = vunpack.c.l.b16 %v174
    %v431 = vunpack.c.l.b16 %v175
    %v432 = vunpack.c.l.b16 %v176
    %v433 = vunpack.c.l.b16 %v177
    %v434 = vunpack.c.l.b16 %v178
    %v435 = vunpack.c.l.b16 %v179
    %v436 = vunpack.c.l.b16 %v180
    %v437 = vunpack.c.l.b16 %v181
    %v438 = vunpack.c.l.b16 %v182
    %v439 = vunpack.c.l.b16 %v183
    %v440 = vunpack.c.l.b16 %v184
    %v441 = vunpack.c.l.b16 %v185
    %v442 = vunpack.c.l.b16 %v186
    %v443 = vunpack.c.l.b16 %v187
    %v444 = vunpack.c.l.b16 %v188
    %v445 = vunpack.c.l.b16 %v189
    %v446 = vunpack.c.l.b16 %v190
    %v447 = vunpack.c.l.b16 %v191
    %v448 = vunpack.c.l.b16 %v192
    %v449 = vunpack.c.l.b16 %v193
    %v450 = vunpack.c.l.b16 %v194
    %v451 = vunpack.c.l.b16 %v195
    %v452 = vunpack.c.l.b16 %v196
    %v453 = vunpack.c.l.b16 %v197
    %v454 = vunpack.c.l.b16 %v198
    %v455 = vunpack.c.l.b16 %v199
    %v456 = vunpack.c.l.b16 %v200
    %v457 = vunpack.c.l.b16 %v201
    %v458 = vunpack.c.l.b16 %v202
    %v459 = vunpack.c.l.b16 %v203
    %v460 = vunpack.c.l.b16 %v204
    %v461 = vunpack.c.l.b16 %v205
    %v462 = vunpack.c.l.b16 %v206
    %v463 = vunpack.c.l.b16 %v207
    %v464 = vunpack.c.l.b16 %v208
    %v465 = vunpack.c.l.b16 %v209
    %v466 = vunpack.c.l.b16 %v210
    %v467 = vunpack.c.l.b16 %v211
    %v468 = vunpack.c.l.b16 %v212
    %v469 = vunpack.c.l.b16 %v213
    %v470 = vunpack.c.l.b16 %v214
    %v471 = vunpack.c.l.b16 %v215
    %v472 = vunpack.c.l.b16 %v216
    %v473 = vunpack.c.l.b16 %v217
    %v474 = vunpack.c.l.b16 %v218
    %v475 = vunpack.c.l.b16 %v219
    %v476 = vunpack.c.l.b16 %v220
    %v477 = vunpack.c.l.b16 %v221
    %v478 = vunpack.c.l.b16 %v222
    %v479 = vunpack.c.l.b16 %v223
    %v480 = vunpack.c.l.b16 %v224
    %v481 = vunpack.c.l.b16 %v225
    %v482 = vunpack.c.l.b16 %v226
    %v483 = vunpack.c.l.b16 %v227
    %v484 = vunpack.c.l.b16 %v228
    %v485 = vunpack.c.l.b16 %v229
    %v486 = vunpack.c.l.b16 %v230
    %v487 = vunpack.c.l.b16 %v231
    %v488 = vunpack.c.l.b16 %v232
    %v489 = vunpack.c.l.b16 %v233
    %v490 = vunpack.c.l.b16 %v234
    %v491 = vunpack.c.l.b16 %v235
    %v492 = vunpack.c.l.b16 %v236
    %v493 = vunpack.c.l.b16 %v237
    %v494 = vunpack.c.l.b16 %v238
    %v495 = vunpack.c.l.b16 %v239
    %v496 = vunpack.c.l.b16 %v240
    %v497 = vunpack.c.l.b16 %v241
    %v498 = vunpack.c.l.b16 %v242
    %v499 = vunpack.c.l.b16 %v243
    %v500 = vunpack.c.l.b16 %v244
    %v501 = vunpack.c.l.b16 %v245
    %v502 = vunpack.c.l.b16 %v246
    %v503 = vunpack.c.l.b16 %v247
    %v504 = vunpack.c.l.b16 %v248
    %v505 = vunpack.c.l.b16 %v249
    %v506 = vunpack.c.l.b16 %v250
    %v507 = vunpack.c.l.b16 %v251
    %v508 = vunpack.c.l.b16 %v252
    %v509 = vunpack.c.l.b16 %v253
    %v510 = vunpack.c.l.b16 %v254
    %v511 = vunpack.c.l.b16 %v255
    %v512 = vunpack.c.l.b16 %v256
    %v513 = vunpack.c.l.b16 %v257
    %v514 = vunpack.c.l.b16 %v258
    %v515 = vunpack.c.l.b16 %v259
    %v516 = vunpack.c.l.b16 %v260
    %v517 = vunpack.c.l.b16 %v261
    %v518 = vunpack.c.l.b16 %v262
    %v519 = vunpack.c.l.b16 %v263
    %v520 = vunpack.c.l.b16 %v264
    %v521 = vunpack.c.l.b16 %v265
    %v522 = vunpack.c.l.b16 %v266
    %v523 = vunpack.c.l.b16 %v267
    %v524 = vunpack.c.l.b16 %v268
    %v525 = vunpack.c.l.b16 %v269
    %v526 = vunpack.c.l.b16 %v270
    %v527 = vunpack.c.l.b16 %v271
    %v528 = vunpack.c.l.b16 %v272
    %v529 = vunpack.c.l.b16 %v273
    %v530 = vunpack.c.l.b16 %v274
    %v531 = vunpack.c.l.b16 %v275
    %v532 = vunpack.c.l.b16 %v276
    %v533 = vunpack.c.l.b16 %v277
    %v534 = vunpack.c.l.b16 %v278
    %v535 = vunpack.c.l.b16 %v279
    %v536 = vunpack.c.l.b16 %v280
    %v537 = vunpack.c.l.b16 %v281
    %v538 = vunpack.c.l.b16 %v282
    %v539 = vunpack.c.l.b16 %v283
    %v540 = vpack.c.b16 %v413, %v412
    %v541 = vpack.c.b16 %v415, %v414
    %v542 = vpack.c.b16 %v417, %v416
    %v543 = vpack.c.b16 %v419, %v418
    %v544 = vpack.c.b16 %v421, %v420
    %v545 = vpack.c.b16 %v423, %v422
    %v546 = vpack.c.b16 %v425, %v424
    %v547 = vpack.c.b16 %v427, %v426
    %v548 = vpack.c.b16 %v429, %v428
    %v549 = vpack.c.b16 %v431, %v430
    %v550 = vpack.c.b16 %v433, %v432
    %v551 = vpack.c.b16 %v435, %v434
    %v552 = vpack.c.b16 %v437, %v436
    %v553 = vpack.c.b16 %v439, %v438
    %v554 = vpack.c.b16 %v441, %v440
    %v555 = vpack.c.b16 %v443, %v442
    %v556 = vpack.c.b16 %v445, %v444
    %v557 = vpack.c.b16 %v447, %v446
    %v558 = vpack.c.b16 %v449, %v448
    %v559 = vpack.c.b16 %v451, %v450
    %v560 = vpack.c.b16 %v453, %v452
    %v561 = vpack.c.b16 %v455, %v454
    %v562 = vpack.c.b16 %v457, %v456
    %v563 = vpack.c.b16 %v459, %v458
    %v564 = vpack.c.b16 %v461, %v460
    %v565 = vpack.c.b16 %v463, %v462
    %v566 = vpack.c.b16 %v465, %v464
    %v567 = vpack.c.b16 %v467, %v466
    %v568 = vpack.c.b16 %v469, %v468
    %v569 = vpack.c.b16 %v471, %v470
    %v570 = vpack.c.b16 %v473, %v472
    %v571 = vpack.c.b16 %v475, %v474
    %v572 = vpack.c.b16 %v477, %v476
    %v573 = vpack.c.b16 %v479, %v478
    %v574 = vpack.c.b16 %v481, %v480
    %v575 = vpack.c.b16 %v483, %v482
    %v576 = vpack.c.b16 %v485, %v484
    %v577 = vpack.c.b16 %v487, %v486
    %v578 = vpack.c.b16 %v489, %v488
    %v579 = vpack.c.b16 %v491, %v490
    %v580 = vpack.c.b16 %v493, %v492
    %v581 = vpack.c.b16 %v495, %v494
    %v582 = vpack.c.b16 %v497, %v496
    %v583 = vpack.c.b16 %v499, %v498
    %v584 = vpack.c.b16 %v501, %v500
    %v585 = vpack.c.b16 %v503, %v502
    %v586 = vpack.c.b16 %v505, %v504
    %v587 = vpack.c.b16 %v507, %v506
    %v588 = vpack.c.b16 %v509, %v508
    %v589 = vpack.c.b16 %v511, %v510
    %v590 = vpack.c.b16 %v513, %v512
    %v591 = vpack.c.b16 %v515, %v514
    %v592 = vpack.c.b16 %v517, %v516
    %v593 = vpack.c.b16 %v519, %v518
    %v594 = vpack.c.b16 %v521, %v520
    %v595 = vpack.c.b16 %v523, %v522
    %v596 = vpack.c.b16 %v525, %v524
    %v597 = vpack.c.b16 %v527, %v526
    %v598 = vpack.c.b16 %v529, %v528
    %v599 = vpack.c.b16 %v531, %v530
    %v600 = vpack.c.b16 %v533, %v532
    %v601 = vpack.c.b16 %v535, %v534
    %v602 = vpack.c.b16 %v537, %v536
    %v603 = vpack.c.b16 %v539, %v538
    %668 = vmatprep.subr.bf16.mxu0 0
    %669 = vmatpush1.bf16.msra.mxu0 %v540
    %670 = vmatprep.subr.bf16.mxu0 0
    %671 = vmatpush1.bf16.msra.mxu0 %v541
    %672 = vmatprep.subr.bf16.mxu0 0
    %673 = vmatpush1.bf16.msra.mxu0 %v542
    %674 = vmatprep.subr.bf16.mxu0 0
    %675 = vmatpush1.bf16.msra.mxu0 %v543
    %676 = vmatprep.subr.bf16.mxu0 0
    %677 = vmatpush1.bf16.msra.mxu0 %v544
    %678 = vmatprep.subr.bf16.mxu0 0
    %679 = vmatpush1.bf16.msra.mxu0 %v545
    %680 = vmatprep.subr.bf16.mxu0 0
    %681 = vmatpush1.bf16.msra.mxu0 %v546
    %682 = vmatprep.subr.bf16.mxu0 0
    %683 = vmatpush1.bf16.msra.mxu0 %v547
    %684 = vmatprep.subr.bf16.mxu0 0
    %685 = vmatpush1.bf16.msra.mxu0 %v548
    %686 = vmatprep.subr.bf16.mxu0 0
    %687 = vmatpush1.bf16.msra.mxu0 %v549
    %688 = vmatprep.subr.bf16.mxu0 0
    %689 = vmatpush1.bf16.msra.mxu0 %v550
    %690 = vmatprep.subr.bf16.mxu0 0
    %691 = vmatpush1.bf16.msra.mxu0 %v551
    %692 = vmatprep.subr.bf16.mxu0 0
    %693 = vmatpush1.bf16.msra.mxu0 %v552
    %694 = vmatprep.subr.bf16.mxu0 0
    %695 = vmatpush1.bf16.msra.mxu0 %v553
    %696 = vmatprep.subr.bf16.mxu0 0
    %697 = vmatpush1.bf16.msra.mxu0 %v554
    %698 = vmatprep.subr.bf16.mxu0 0
    %699 = vmatpush1.bf16.msra.mxu0 %v555
    %700 = vmatprep.mubr.bf16.mxu0 %v149
    %701 = vmatmul.mubr.bf16.gmra.mrb[0].mxu0 %v148
    %v702 = vpop.f32.mrb[0].mxu0
    %v703 = vadd.f32 0.0, %v702
    %v704 = vpop.f32.mrb[0].mxu0
    %v705 = vpop.f32.mrb[0].mxu0
    %v706 = vpop.f32.mrb[0].mxu0
    %707 = vdwg.mxu0
    %708 = vmatprep.subr.bf16.mxu0 0
    %709 = vmatpush1.bf16.msra.mxu0 %v556
    %710 = vmatprep.subr.bf16.mxu0 0
    %711 = vmatpush1.bf16.msra.mxu0 %v557
    %712 = vmatprep.subr.bf16.mxu0 0
    %713 = vmatpush1.bf16.msra.mxu0 %v558
    %714 = vmatprep.subr.bf16.mxu0 0
    %715 = vmatpush1.bf16.msra.mxu0 %v559
    %716 = vmatprep.subr.bf16.mxu0 0
    %717 = vmatpush1.bf16.msra.mxu0 %v560
    %718 = vmatprep.subr.bf16.mxu0 0
    %719 = vmatpush1.bf16.msra.mxu0 %v561
    %720 = vmatprep.subr.bf16.mxu0 0
    %721 = vmatpush1.bf16.msra.mxu0 %v562
    %722 = vmatprep.subr.bf16.mxu0 0
    %723 = vmatpush1.bf16.msra.mxu0 %v563
    %724 = vmatprep.subr.bf16.mxu0 0
    %725 = vmatpush1.bf16.msra.mxu0 %v564
    %726 = vmatprep.subr.bf16.mxu0 0
    %727 = vmatpush1.bf16.msra.mxu0 %v565
    %728 = vmatprep.subr.bf16.mxu0 0
    %729 = vmatpush1.bf16.msra.mxu0 %v566
    %730 = vmatprep.subr.bf16.mxu0 0
    %731 = vmatpush1.bf16.msra.mxu0 %v567
    %732 = vmatprep.subr.bf16.mxu0 0
    %733 = vmatpush1.bf16.msra.mxu0 %v568
    %734 = vmatprep.subr.bf16.mxu0 0
    %735 = vmatpush1.bf16.msra.mxu0 %v569
    %736 = vmatprep.subr.bf16.mxu0 0
    %737 = vmatpush1.bf16.msra.mxu0 %v570
    %738 = vmatprep.subr.bf16.mxu0 0
    %739 = vmatpush1.bf16.msra.mxu0 %v571
    %740 = vmatprep.mubr.bf16.mxu0 %v151
    %741 = vmatmul.mubr.bf16.gmra.mrb[0].mxu0 %v150
    %v742 = vpop.f32.mrb[0].mxu0
    %v743 = vadd.f32 %v703, %v742
    %v744 = vpop.f32.mrb[0].mxu0
    %v745 = vpop.f32.mrb[0].mxu0
    %v746 = vpop.f32.mrb[0].mxu0
    %747 = vdwg.mxu0
    %748 = vmatprep.subr.bf16.mxu0 0
    %749 = vmatpush1.bf16.msra.mxu0 %v572
    %750 = vmatprep.subr.bf16.mxu0 0
    %751 = vmatpush1.bf16.msra.mxu0 %v573
    %752 = vmatprep.subr.bf16.mxu0 0
    %753 = vmatpush1.bf16.msra.mxu0 %v574
    %754 = vmatprep.subr.bf16.mxu0 0
    %755 = vmatpush1.bf16.msra.mxu0 %v575
    %756 = vmatprep.subr.bf16.mxu0 0
    %757 = vmatpush1.bf16.msra.mxu0 %v576
    %758 = vmatprep.subr.bf16.mxu0 0
    %759 = vmatpush1.bf16.msra.mxu0 %v577
    %760 = vmatprep.subr.bf16.mxu0 0
    %761 = vmatpush1.bf16.msra.mxu0 %v578
    %762 = vmatprep.subr.bf16.mxu0 0
    %763 = vmatpush1.bf16.msra.mxu0 %v579
    %764 = vmatprep.subr.bf16.mxu0 0
    %765 = vmatpush1.bf16.msra.mxu0 %v580
    %766 = vmatprep.subr.bf16.mxu0 0
    %767 = vmatpush1.bf16.msra.mxu0 %v581
    %768 = vmatprep.subr.bf16.mxu0 0
    %769 = vmatpush1.bf16.msra.mxu0 %v582
    %770 = vmatprep.subr.bf16.mxu0 0
    %771 = vmatpush1.bf16.msra.mxu0 %v583
    %772 = vmatprep.subr.bf16.mxu0 0
    %773 = vmatpush1.bf16.msra.mxu0 %v584
    %774 = vmatprep.subr.bf16.mxu0 0
    %775 = vmatpush1.bf16.msra.mxu0 %v585
    %776 = vmatprep.subr.bf16.mxu0 0
    %777 = vmatpush1.bf16.msra.mxu0 %v586
    %778 = vmatprep.subr.bf16.mxu0 0
    %779 = vmatpush1.bf16.msra.mxu0 %v587
    %780 = vmatprep.mubr.bf16.mxu0 %v153
    %781 = vmatmul.mubr.bf16.gmra.mrb[0].mxu0 %v152
    %v782 = vpop.f32.mrb[0].mxu0
    %v783 = vadd.f32 %v743, %v782
    %v784 = vpop.f32.mrb[0].mxu0
    %v785 = vpop.f32.mrb[0].mxu0
    %v786 = vpop.f32.mrb[0].mxu0
    %787 = vdwg.mxu0
    %788 = vmatprep.subr.bf16.mxu0 0
    %789 = vmatpush1.bf16.msra.mxu0 %v588
    %790 = vmatprep.subr.bf16.mxu0 0
    %791 = vmatpush1.bf16.msra.mxu0 %v589
    %792 = vmatprep.subr.bf16.mxu0 0
    %793 = vmatpush1.bf16.msra.mxu0 %v590
    %794 = vmatprep.subr.bf16.mxu0 0
    %795 = vmatpush1.bf16.msra.mxu0 %v591
    %796 = vmatprep.subr.bf16.mxu0 0
    %797 = vmatpush1.bf16.msra.mxu0 %v592
    %798 = vmatprep.subr.bf16.mxu0 0
    %799 = vmatpush1.bf16.msra.mxu0 %v593
    %800 = vmatprep.subr.bf16.mxu0 0
    %801 = vmatpush1.bf16.msra.mxu0 %v594
    %802 = vmatprep.subr.bf16.mxu0 0
    %803 = vmatpush1.bf16.msra.mxu0 %v595
    %804 = vmatprep.subr.bf16.mxu0 0
    %805 = vmatpush1.bf16.msra.mxu0 %v596
    %806 = vmatprep.subr.bf16.mxu0 0
    %807 = vmatpush1.bf16.msra.mxu0 %v597
    %808 = vmatprep.subr.bf16.mxu0 0
    %809 = vmatpush1.bf16.msra.mxu0 %v598
    %810 = vmatprep.subr.bf16.mxu0 0
    %811 = vmatpush1.bf16.msra.mxu0 %v599
    %812 = vmatprep.subr.bf16.mxu0 0
    %813 = vmatpush1.bf16.msra.mxu0 %v600
    %814 = vmatprep.subr.bf16.mxu0 0
    %815 = vmatpush1.bf16.msra.mxu0 %v601
    %816 = vmatprep.subr.bf16.mxu0 0
    %817 = vmatpush1.bf16.msra.mxu0 %v602
    %818 = vmatprep.subr.bf16.mxu0 0
    %819 = vmatpush1.bf16.msra.mxu0 %v603
    %820 = vmatprep.mubr.bf16.mxu0 %v155
    %821 = vmatmul.mubr.bf16.gmra.mrb[0].mxu0 %v154
    %v822 = vpop.f32.mrb[0].mxu0
    %v823 = vadd.f32 %v783, %v822
    %v824 = vpop.f32.mrb[0].mxu0
    %v825 = vpop.f32.mrb[0].mxu0
    %v826 = vpop.f32.mrb[0].mxu0
    %827 = vdwg.mxu0
    %v828 = vld [vmem:[#allocation9] sm:$0x1]
    %v829 = vlaneseq
    %v830 = vshrl.u32 %v829, 7
    %v831 = vsub.s32 0, %v830
    %v832 = vrot.slane %v828, %v831
    %v833 = vadd.f32 %v823, %v832
    %v834 = vmax.f32 %v833, 0.0
    %v835 = vld [vmem:[#allocation9 + $0x18] sm:$0xff]
    %v836 = vld [vmem:[#allocation9 + $0x20] sm:$0xff]
    %v837 = vld [vmem:[#allocation9 + $0x28] sm:$0xff]
    %v838 = vld [vmem:[#allocation9 + $0x30] sm:$0xff]
    %v839 = vld [vmem:[#allocation9 + $0x38] sm:$0xff]
    %v840 = vld [vmem:[#allocation9 + $0x40] sm:$0xff]
    %v841 = vld [vmem:[#allocation9 + $0x48] sm:$0xff]
    %v842 = vld [vmem:[#allocation9 + $0x50] sm:$0xff]
    %v843 = vld [vmem:[#allocation9 + $0x98] sm:$0x1]
    %v844 = vlaneseq
    %v845 = vshrl.u32 %v844, 7
    %v846 = vsub.s32 0, %v845
    %v847 = vrot.slane %v843, %v846
    %vm848 = vcmask 523264
    %v850 = vsel %vm848, %v834, 0
    %852 = vmatprep.subr.mxu0 0.0
    %853 = vmatpush1.msra.mxu0 %v835
    %854 = vmatprep.subr.mxu0 0.0
    %855 = vmatpush1.msra.mxu0 %v836
    %856 = vmatprep.subr.mxu0 0.0
    %857 = vmatpush1.msra.mxu0 %v837
    %858 = vmatprep.subr.mxu0 0.0
    %859 = vmatpush1.msra.mxu0 %v838
    %860 = vmatprep.subr.mxu0 0.0
    %861 = vmatpush1.msra.mxu0 %v839
    %862 = vmatprep.subr.mxu0 0.0
    %863 = vmatpush1.msra.mxu0 %v840
    %864 = vmatprep.subr.mxu0 0.0
    %865 = vmatpush1.msra.mxu0 %v841
    %866 = vmatprep.subr.mxu0 0.0
    %867 = vmatpush1.msra.mxu0 %v842
    %868 = vmatprep.subr.mxu0 0.0
    %869 = vmatpush1.msra.mxu0 0.0
    %870 = vmatprep.subr.mxu0 0.0
    %871 = vmatpush1.msra.mxu0 0.0
    %872 = vmatprep.subr.mxu0 0.0
    %873 = vmatpush1.msra.mxu0 0.0
    %874 = vmatprep.subr.mxu0 0.0
    %875 = vmatpush1.msra.mxu0 0.0
    %876 = vmatprep.subr.mxu0 0.0
    %877 = vmatpush1.msra.mxu0 0.0
    %878 = vmatprep.subr.mxu0 0.0
    %879 = vmatpush1.msra.mxu0 0.0
    %880 = vmatprep.subr.mxu0 0.0
    %881 = vmatpush1.msra.mxu0 0.0
    %882 = vmatprep.subr.mxu0 0.0
    %883 = vmatpush1.msra.mxu0 0.0
    %884 = vmatprep.subr.mxu0 0.0
    %885 = vmatpush1.msra.mxu0 0.0
    %886 = vmatprep.subr.mxu0 0.0
    %887 = vmatpush1.msra.mxu0 0.0
    %888 = vmatprep.subr.mxu0 0.0
    %889 = vmatpush1.msra.mxu0 0.0
    %890 = vmatprep.subr.mxu0 0.0
    %891 = vmatpush1.msra.mxu0 0.0
    %892 = vmatprep.subr.mxu0 0.0
    %893 = vmatpush1.msra.mxu0 0.0
    %894 = vmatprep.subr.mxu0 0.0
    %895 = vmatpush1.msra.mxu0 0.0
    %896 = vmatprep.subr.mxu0 0.0
    %897 = vmatpush1.msra.mxu0 0.0
    %898 = vmatprep.subr.mxu0 0.0
    %899 = vmatpush1.msra.mxu0 0.0
    %900 = vmatprep.subr.mxu0 0.0
    %901 = vmatpush1.msra.mxu0 0.0
    %902 = vmatprep.subr.mxu0 0.0
    %903 = vmatpush1.msra.mxu0 0.0
    %904 = vmatprep.subr.mxu0 0.0
    %905 = vmatpush1.msra.mxu0 0.0
    %906 = vmatprep.subr.mxu0 0.0
    %907 = vmatpush1.msra.mxu0 0.0
    %908 = vmatprep.subr.mxu0 0.0
    %909 = vmatpush1.msra.mxu0 0.0
    %910 = vmatprep.subr.mxu0 0.0
    %911 = vmatpush1.msra.mxu0 0.0
    %912 = vmatprep.subr.mxu0 0.0
    %913 = vmatpush1.msra.mxu0 0.0
    %914 = vmatprep.subr.mxu0 0.0
    %915 = vmatpush1.msra.mxu0 0.0
    %916 = vmatprep.mubr.f32.mxu0 0.0
    %917 = vmatmul.mubr.f32.gmra.mrb[0].mxu0 %v850
    %v918 = vpop.f32.mrb[0].mxu0
    %v919 = vadd.f32 %v847, %v918
    %v920 = vpop.f32.mrb[0].mxu0
    %921 = vdwg.mxu0
    %v922 = vmax.f32 %v919, 0.0
    %v923 = vld [vmem:[#allocation9 + $0xa0] sm:$0xff]
    %v924 = vld [vmem:[#allocation9 + $0xa8] sm:$0xff]
    %v925 = vld [vmem:[#allocation9 + $0xb0] sm:$0xff]
    %v926 = vld [vmem:[#allocation9 + $0xb8] sm:$0xff]
    %v927 = vld [vmem:[#allocation9 + $0xc0] sm:$0xff]
    %v928 = vld [vmem:[#allocation9 + $0xc8] sm:$0xff]
    %v929 = vld [vmem:[#allocation9 + $0xd0] sm:$0xff]
    %v930 = vld [vmem:[#allocation9 + $0xd8] sm:$0xff]
    %v931 = vld [vmem:[#allocation9 + $0x120] sm:$0x1]
    %v932 = vlaneseq
    %v933 = vshrl.u32 %v932, 7
    %v934 = vsub.s32 0, %v933
    %v935 = vrot.slane %v931, %v934
    %v937 = vsel %vm848, %v922, 0
    %939 = vmatprep.subr.mxu0 0.0
    %940 = vmatpush1.msra.mxu0 %v923
    %941 = vmatprep.subr.mxu0 0.0
    %942 = vmatpush1.msra.mxu0 %v924
    %943 = vmatprep.subr.mxu0 0.0
    %944 = vmatpush1.msra.mxu0 %v925
    %945 = vmatprep.subr.mxu0 0.0
    %946 = vmatpush1.msra.mxu0 %v926
    %947 = vmatprep.subr.mxu0 0.0
    %948 = vmatpush1.msra.mxu0 %v927
    %949 = vmatprep.subr.mxu0 0.0
    %950 = vmatpush1.msra.mxu0 %v928
    %951 = vmatprep.subr.mxu0 0.0
    %952 = vmatpush1.msra.mxu0 %v929
    %953 = vmatprep.subr.mxu0 0.0
    %954 = vmatpush1.msra.mxu0 %v930
    %955 = vmatprep.subr.mxu0 0.0
    %956 = vmatpush1.msra.mxu0 0.0
    %957 = vmatprep.subr.mxu0 0.0
    %958 = vmatpush1.msra.mxu0 0.0
    %959 = vmatprep.subr.mxu0 0.0
    %960 = vmatpush1.msra.mxu0 0.0
    %961 = vmatprep.subr.mxu0 0.0
    %962 = vmatpush1.msra.mxu0 0.0
    %963 = vmatprep.subr.mxu0 0.0
    %964 = vmatpush1.msra.mxu0 0.0
    %965 = vmatprep.subr.mxu0 0.0
    %966 = vmatpush1.msra.mxu0 0.0
    %967 = vmatprep.subr.mxu0 0.0
    %968 = vmatpush1.msra.mxu0 0.0
    %969 = vmatprep.subr.mxu0 0.0
    %970 = vmatpush1.msra.mxu0 0.0
    %971 = vmatprep.subr.mxu0 0.0
    %972 = vmatpush1.msra.mxu0 0.0
    %973 = vmatprep.subr.mxu0 0.0
    %974 = vmatpush1.msra.mxu0 0.0
    %975 = vmatprep.subr.mxu0 0.0
    %976 = vmatpush1.msra.mxu0 0.0
    %977 = vmatprep.subr.mxu0 0.0
    %978 = vmatpush1.msra.mxu0 0.0
    %979 = vmatprep.subr.mxu0 0.0
    %980 = vmatpush1.msra.mxu0 0.0
    %981 = vmatprep.subr.mxu0 0.0
    %982 = vmatpush1.msra.mxu0 0.0
    %983 = vmatprep.subr.mxu0 0.0
    %984 = vmatpush1.msra.mxu0 0.0
    %985 = vmatprep.subr.mxu0 0.0
    %986 = vmatpush1.msra.mxu0 0.0
    %987 = vmatprep.subr.mxu0 0.0
    %988 = vmatpush1.msra.mxu0 0.0
    %989 = vmatprep.subr.mxu0 0.0
    %990 = vmatpush1.msra.mxu0 0.0
    %991 = vmatprep.subr.mxu0 0.0
    %992 = vmatpush1.msra.mxu0 0.0
    %993 = vmatprep.subr.mxu0 0.0
    %994 = vmatpush1.msra.mxu0 0.0
    %995 = vmatprep.subr.mxu0 0.0
    %996 = vmatpush1.msra.mxu0 0.0
    %997 = vmatprep.subr.mxu0 0.0
    %998 = vmatpush1.msra.mxu0 0.0
    %999 = vmatprep.subr.mxu0 0.0
    %1000 = vmatpush1.msra.mxu0 0.0
    %1001 = vmatprep.subr.mxu0 0.0
    %1002 = vmatpush1.msra.mxu0 0.0
    %1003 = vmatprep.mubr.f32.mxu0 0.0
    %1004 = vmatmul.mubr.f32.gmra.mrb[0].mxu0 %v937
    %v1005 = vpop.f32.mrb[0].mxu0
    %v1006 = vadd.f32 %v935, %v1005
    %v1007 = vpop.f32.mrb[0].mxu0
    %1008 = vdwg.mxu0
    %v1009 = vmul.f32 %v1006, 0.5
    %v1010 = vmul.f32 %v1009, 1.442695
    %v1011 = vpow.pop %v1010
    %1013 = vrot.lane.b32.xlu0 %v1011, 112
    %v1014 = vpop.permute.xlu0 %1013
    %v1016 = vmul.f32 %v102, %v1014
    %v1017 = vadd.f32 %v1006, %v1016
    %vm1018 = vcmask 123904
    %1019 = vst.msk [vmem:[#allocation11] sm:$0x3] %vm1018, %v1006
    %1021 = vrot.lane.b32.xlu0 %v1006, 16
    %v1022 = vpop.permute.xlu0 %1021
    %vm1024 = vcmask 386304
    %1025 = vst.msk [vmem:[#allocation11] sm:$0x3] %vm1024, %v1022
    %1027 = vrot.lane.b32.xlu0 %v1017, 64
    %v1028 = vpop.permute.xlu0 %1027
    %vm1030 = vcmask 648704
    %1031 = vst.msk [vmem:[#allocation11] sm:$0x3] %vm1030, %v1028
    %v1032 = vld [vmem:[#allocation9 + $0x1] sm:$0x1]
    %v1033 = vlaneseq
    %v1034 = vshrl.u32 %v1033, 7
    %v1035 = vsub.s32 0, %v1034
    %v1036 = vrot.slane %v1032, %v1035
    %1038 = vrot.lane.b32.xlu0 %v1036, 64
    %v1039 = vpop.permute.xlu0 %1038
    %v1041 = vadd.f32 %v823, %v1039
    %v1042 = vld [vmem:[#allocation9 + $0x8] sm:$0xff]
    %v1043 = vld [vmem:[#allocation9 + $0x10] sm:$0xff]
    %vm1044 = vcmask 130048
    %v1045 = vsel %vm1044, %v1017, 0
    %1047 = vmatprep.subr.mxu0 0.0
    %1048 = vmatpush1.msra.mxu0 %v1042
    %1049 = vmatprep.subr.mxu0 0.0
    %1050 = vmatpush1.msra.mxu0 %v1043
    %1051 = vmatprep.subr.mxu0 0.0
    %1052 = vmatpush1.msra.mxu0 0.0
    %1053 = vmatprep.subr.mxu0 0.0
    %1054 = vmatpush1.msra.mxu0 0.0
    %1055 = vmatprep.subr.mxu0 0.0
    %1056 = vmatpush1.msra.mxu0 0.0
    %1057 = vmatprep.subr.mxu0 0.0
    %1058 = vmatpush1.msra.mxu0 0.0
    %1059 = vmatprep.subr.mxu0 0.0
    %1060 = vmatpush1.msra.mxu0 0.0
    %1061 = vmatprep.subr.mxu0 0.0
    %1062 = vmatpush1.msra.mxu0 0.0
    %1063 = vmatprep.subr.mxu0 0.0
    %1064 = vmatpush1.msra.mxu0 0.0
    %1065 = vmatprep.subr.mxu0 0.0
    %1066 = vmatpush1.msra.mxu0 0.0
    %1067 = vmatprep.subr.mxu0 0.0
    %1068 = vmatpush1.msra.mxu0 0.0
    %1069 = vmatprep.subr.mxu0 0.0
    %1070 = vmatpush1.msra.mxu0 0.0
    %1071 = vmatprep.subr.mxu0 0.0
    %1072 = vmatpush1.msra.mxu0 0.0
    %1073 = vmatprep.subr.mxu0 0.0
    %1074 = vmatpush1.msra.mxu0 0.0
    %1075 = vmatprep.subr.mxu0 0.0
    %1076 = vmatpush1.msra.mxu0 0.0
    %1077 = vmatprep.subr.mxu0 0.0
    %1078 = vmatpush1.msra.mxu0 0.0
    %1079 = vmatprep.subr.mxu0 0.0
    %1080 = vmatpush1.msra.mxu0 0.0
    %1081 = vmatprep.subr.mxu0 0.0
    %1082 = vmatpush1.msra.mxu0 0.0
    %1083 = vmatprep.subr.mxu0 0.0
    %1084 = vmatpush1.msra.mxu0 0.0
    %1085 = vmatprep.subr.mxu0 0.0
    %1086 = vmatpush1.msra.mxu0 0.0
    %1087 = vmatprep.subr.mxu0 0.0
    %1088 = vmatpush1.msra.mxu0 0.0
    %1089 = vmatprep.subr.mxu0 0.0
    %1090 = vmatpush1.msra.mxu0 0.0
    %1091 = vmatprep.subr.mxu0 0.0
    %1092 = vmatpush1.msra.mxu0 0.0
    %1093 = vmatprep.subr.mxu0 0.0
    %1094 = vmatpush1.msra.mxu0 0.0
    %1095 = vmatprep.subr.mxu0 0.0
    %1096 = vmatpush1.msra.mxu0 0.0
    %1097 = vmatprep.subr.mxu0 0.0
    %1098 = vmatpush1.msra.mxu0 0.0
    %1099 = vmatprep.subr.mxu0 0.0
    %1100 = vmatpush1.msra.mxu0 0.0
    %1101 = vmatprep.subr.mxu0 0.0
    %1102 = vmatpush1.msra.mxu0 0.0
    %1103 = vmatprep.subr.mxu0 0.0
    %1104 = vmatpush1.msra.mxu0 0.0
    %1105 = vmatprep.subr.mxu0 0.0
    %1106 = vmatpush1.msra.mxu0 0.0
    %1107 = vmatprep.subr.mxu0 0.0
    %1108 = vmatpush1.msra.mxu0 0.0
    %1109 = vmatprep.subr.mxu0 0.0
    %1110 = vmatpush1.msra.mxu0 0.0
    %1111 = vmatprep.mubr.f32.mxu0 0.0
    %1112 = vmatmul.mubr.f32.gmra.mrb[0].mxu0 %v1045
    %v1113 = vpop.f32.mrb[0].mxu0
    %v1114 = vadd.f32 0.0, %v1113
    %v1115 = vpop.f32.mrb[0].mxu0
    %1116 = vdwg.mxu0
    %1118 = vrot.lane.b32.xlu0 %v1114, 64
    %v1119 = vpop.permute.xlu0 %1118
    %v1121 = vadd.f32 %v1041, %v1119
    %v1122 = vmax.f32 %v1121, 0.0
    %v1123 = vld [vmem:[#allocation9 + $0x58] sm:$0xff]
    %v1124 = vld [vmem:[#allocation9 + $0x60] sm:$0xff]
    %v1125 = vld [vmem:[#allocation9 + $0x68] sm:$0xff]
    %v1126 = vld [vmem:[#allocation9 + $0x70] sm:$0xff]
    %v1127 = vld [vmem:[#allocation9 + $0x78] sm:$0xff]
    %v1128 = vld [vmem:[#allocation9 + $0x80] sm:$0xff]
    %v1129 = vld [vmem:[#allocation9 + $0x88] sm:$0xff]
    %v1130 = vld [vmem:[#allocation9 + $0x90] sm:$0xff]
    %v1131 = vld [vmem:[#allocation9 + $0x99] sm:$0x1]
    %v1132 = vlaneseq
    %v1133 = vshrl.u32 %v1132, 7
    %v1134 = vsub.s32 0, %v1133
    %v1135 = vrot.slane %v1131, %v1134
    %1137 = vrot.lane.b32.xlu0 %v1122, 64
    %v1138 = vpop.permute.xlu0 %1137
    %v1139 = vsel %vm848, %v1138, 0
    %1141 = vmatprep.subr.mxu0 0.0
    %1142 = vmatpush1.msra.mxu0 %v1123
    %1143 = vmatprep.subr.mxu0 0.0
    %1144 = vmatpush1.msra.mxu0 %v1124
    %1145 = vmatprep.subr.mxu0 0.0
    %1146 = vmatpush1.msra.mxu0 %v1125
    %1147 = vmatprep.subr.mxu0 0.0
    %1148 = vmatpush1.msra.mxu0 %v1126
    %1149 = vmatprep.subr.mxu0 0.0
    %1150 = vmatpush1.msra.mxu0 %v1127
    %1151 = vmatprep.subr.mxu0 0.0
    %1152 = vmatpush1.msra.mxu0 %v1128
    %1153 = vmatprep.subr.mxu0 0.0
    %1154 = vmatpush1.msra.mxu0 %v1129
    %1155 = vmatprep.subr.mxu0 0.0
    %1156 = vmatpush1.msra.mxu0 %v1130
    %1157 = vmatprep.subr.mxu0 0.0
    %1158 = vmatpush1.msra.mxu0 0.0
    %1159 = vmatprep.subr.mxu0 0.0
    %1160 = vmatpush1.msra.mxu0 0.0
    %1161 = vmatprep.subr.mxu0 0.0
    %1162 = vmatpush1.msra.mxu0 0.0
    %1163 = vmatprep.subr.mxu0 0.0
    %1164 = vmatpush1.msra.mxu0 0.0
    %1165 = vmatprep.subr.mxu0 0.0
    %1166 = vmatpush1.msra.mxu0 0.0
    %1167 = vmatprep.subr.mxu0 0.0
    %1168 = vmatpush1.msra.mxu0 0.0
    %1169 = vmatprep.subr.mxu0 0.0
    %1170 = vmatpush1.msra.mxu0 0.0
    %1171 = vmatprep.subr.mxu0 0.0
    %1172 = vmatpush1.msra.mxu0 0.0
    %1173 = vmatprep.subr.mxu0 0.0
    %1174 = vmatpush1.msra.mxu0 0.0
    %1175 = vmatprep.subr.mxu0 0.0
    %1176 = vmatpush1.msra.mxu0 0.0
    %1177 = vmatprep.subr.mxu0 0.0
    %1178 = vmatpush1.msra.mxu0 0.0
    %1179 = vmatprep.subr.mxu0 0.0
    %1180 = vmatpush1.msra.mxu0 0.0
    %1181 = vmatprep.subr.mxu0 0.0
    %1182 = vmatpush1.msra.mxu0 0.0
    %1183 = vmatprep.subr.mxu0 0.0
    %1184 = vmatpush1.msra.mxu0 0.0
    %1185 = vmatprep.subr.mxu0 0.0
    %1186 = vmatpush1.msra.mxu0 0.0
    %1187 = vmatprep.subr.mxu0 0.0
    %1188 = vmatpush1.msra.mxu0 0.0
    %1189 = vmatprep.subr.mxu0 0.0
    %1190 = vmatpush1.msra.mxu0 0.0
    %1191 = vmatprep.subr.mxu0 0.0
    %1192 = vmatpush1.msra.mxu0 0.0
    %1193 = vmatprep.subr.mxu0 0.0
    %1194 = vmatpush1.msra.mxu0 0.0
    %1195 = vmatprep.subr.mxu0 0.0
    %1196 = vmatpush1.msra.mxu0 0.0
    %1197 = vmatprep.subr.mxu0 0.0
    %1198 = vmatpush1.msra.mxu0 0.0
    %1199 = vmatprep.subr.mxu0 0.0
    %1200 = vmatpush1.msra.mxu0 0.0
    %1201 = vmatprep.subr.mxu0 0.0
    %1202 = vmatpush1.msra.mxu0 0.0
    %1203 = vmatprep.subr.mxu0 0.0
    %1204 = vmatpush1.msra.mxu0 0.0
    %1205 = vmatprep.mubr.f32.mxu0 0.0
    %1206 = vmatmul.mubr.f32.gmra.mrb[0].mxu0 %v1139
    %v1207 = vpop.f32.mrb[0].mxu0
    %v1208 = vadd.f32 %v1135, %v1207
    %v1209 = vpop.f32.mrb[0].mxu0
    %1210 = vdwg.mxu0
    %v1211 = vmax.f32 %v1208, 0.0
    %v1212 = vld [vmem:[#allocation9 + $0xe0] sm:$0xff]
    %v1213 = vld [vmem:[#allocation9 + $0xe8] sm:$0xff]
    %v1214 = vld [vmem:[#allocation9 + $0xf0] sm:$0xff]
    %v1215 = vld [vmem:[#allocation9 + $0xf8] sm:$0xff]
    %v1216 = vld [vmem:[#allocation9 + $0x100] sm:$0xff]
    %v1217 = vld [vmem:[#allocation9 + $0x108] sm:$0xff]
    %v1218 = vld [vmem:[#allocation9 + $0x110] sm:$0xff]
    %v1219 = vld [vmem:[#allocation9 + $0x118] sm:$0xff]
    %v1220 = vld [vmem:[#allocation9 + $0x121] sm:$0x1]
    %v1221 = vlaneseq
    %v1222 = vshrl.u32 %v1221, 7
    %v1223 = vsub.s32 0, %v1222
    %v1224 = vrot.slane %v1220, %v1223
    %v1226 = vsel %vm848, %v1211, 0
    %1228 = vmatprep.subr.mxu0 0.0
    %1229 = vmatpush1.msra.mxu0 %v1212
    %1230 = vmatprep.subr.mxu0 0.0
    %1231 = vmatpush1.msra.mxu0 %v1213
    %1232 = vmatprep.subr.mxu0 0.0
    %1233 = vmatpush1.msra.mxu0 %v1214
    %1234 = vmatprep.subr.mxu0 0.0
    %1235 = vmatpush1.msra.mxu0 %v1215
    %1236 = vmatprep.subr.mxu0 0.0
    %1237 = vmatpush1.msra.mxu0 %v1216
    %1238 = vmatprep.subr.mxu0 0.0
    %1239 = vmatpush1.msra.mxu0 %v1217
    %1240 = vmatprep.subr.mxu0 0.0
    %1241 = vmatpush1.msra.mxu0 %v1218
    %1242 = vmatprep.subr.mxu0 0.0
    %1243 = vmatpush1.msra.mxu0 %v1219
    %1244 = vmatprep.subr.mxu0 0.0
    %1245 = vmatpush1.msra.mxu0 0.0
    %1246 = vmatprep.subr.mxu0 0.0
    %1247 = vmatpush1.msra.mxu0 0.0
    %1248 = vmatprep.subr.mxu0 0.0
    %1249 = vmatpush1.msra.mxu0 0.0
    %1250 = vmatprep.subr.mxu0 0.0
    %1251 = vmatpush1.msra.mxu0 0.0
    %1252 = vmatprep.subr.mxu0 0.0
    %1253 = vmatpush1.msra.mxu0 0.0
    %1254 = vmatprep.subr.mxu0 0.0
    %1255 = vmatpush1.msra.mxu0 0.0
    %1256 = vmatprep.subr.mxu0 0.0
    %1257 = vmatpush1.msra.mxu0 0.0
    %1258 = vmatprep.subr.mxu0 0.0
    %1259 = vmatpush1.msra.mxu0 0.0
    %1260 = vmatprep.subr.mxu0 0.0
    %1261 = vmatpush1.msra.mxu0 0.0
    %1262 = vmatprep.subr.mxu0 0.0
    %1263 = vmatpush1.msra.mxu0 0.0
    %1264 = vmatprep.subr.mxu0 0.0
    %1265 = vmatpush1.msra.mxu0 0.0
    %1266 = vmatprep.subr.mxu0 0.0
    %1267 = vmatpush1.msra.mxu0 0.0
    %1268 = vmatprep.subr.mxu0 0.0
    %1269 = vmatpush1.msra.mxu0 0.0
    %1270 = vmatprep.subr.mxu0 0.0
    %1271 = vmatpush1.msra.mxu0 0.0
    %1272 = vmatprep.subr.mxu0 0.0
    %1273 = vmatpush1.msra.mxu0 0.0
    %1274 = vmatprep.subr.mxu0 0.0
    %1275 = vmatpush1.msra.mxu0 0.0
    %1276 = vmatprep.subr.mxu0 0.0
    %1277 = vmatpush1.msra.mxu0 0.0
    %1278 = vmatprep.subr.mxu0 0.0
    %1279 = vmatpush1.msra.mxu0 0.0
    %1280 = vmatprep.subr.mxu0 0.0
    %1281 = vmatpush1.msra.mxu0 0.0
    %1282 = vmatprep.subr.mxu0 0.0
    %1283 = vmatpush1.msra.mxu0 0.0
    %1284 = vmatprep.subr.mxu0 0.0
    %1285 = vmatpush1.msra.mxu0 0.0
    %1286 = vmatprep.subr.mxu0 0.0
    %1287 = vmatpush1.msra.mxu0 0.0
    %1288 = vmatprep.subr.mxu0 0.0
    %1289 = vmatpush1.msra.mxu0 0.0
    %1290 = vmatprep.subr.mxu0 0.0
    %1291 = vmatpush1.msra.mxu0 0.0
    %1292 = vmatprep.mubr.f32.mxu0 0.0
    %1293 = vmatmul.mubr.f32.gmra.mrb[0].mxu0 %v1226
    %v1294 = vpop.f32.mrb[0].mxu0
    %v1295 = vadd.f32 %v1224, %v1294
    %v1296 = vpop.f32.mrb[0].mxu0
    %1297 = vdwg.mxu0
    %v1298 = vmul.f32 %v1295, 0.5
    %v1299 = vmul.f32 %v1298, 1.442695
    %v1300 = vpow.pop %v1299
    %v1301 = vmul.f32 %v102, %v1300
    %1303 = vrot.lane.b32.xlu0 %v1301, 112
    %v1304 = vpop.permute.xlu0 %1303
    %v1306 = vadd.f32 %v1295, %v1304
    %1308 = vrot.lane.b32.xlu0 %v1295, 16
    %v1309 = vpop.permute.xlu0 %1308
    %vm1311 = vcmask 255104
    %1312 = vst.msk [vmem:[#allocation11] sm:$0x3] %vm1311, %v1309
    %1313 = vrot.lane.b32.xlu0 %v1295, 32
    %v1314 = vpop.permute.xlu0 %1313
    %vm1316 = vcmask 517504
    %1317 = vst.msk [vmem:[#allocation11] sm:$0x3] %vm1316, %v1314
    %1319 = vrot.lane.b32.xlu0 %v1306, 80
    %v1320 = vpop.permute.xlu0 %1319
    %vm1322 = vcmask 779904
    %1323 = vst.msk [vmem:[#allocation11] sm:$0x3] %vm1322, %v1320
    %v1324 = vld [vmem:[#allocation9 + $0x128] sm:$0xff]
    %v1325 = vld [vmem:[#allocation9 + $0x130] sm:$0xff]
    %v1326 = vld [vmem:[#allocation9 + $0x138] sm:$0xff]
    %v1327 = vld [vmem:[#allocation9 + $0x140] sm:$0xff]
    %v1328 = vsel %vm1044, %v1306, 0
    %1330 = vmatprep.subr.mxu0 0.0
    %1331 = vmatpush1.msra.mxu0 %v1326
    %1332 = vmatprep.subr.mxu0 0.0
    %1333 = vmatpush1.msra.mxu0 %v1327
    %1334 = vmatprep.subr.mxu0 0.0
    %1335 = vmatpush1.msra.mxu0 0.0
    %1336 = vmatprep.subr.mxu0 0.0
    %1337 = vmatpush1.msra.mxu0 0.0
    %1338 = vmatprep.subr.mxu0 0.0
    %1339 = vmatpush1.msra.mxu0 0.0
    %1340 = vmatprep.subr.mxu0 0.0
    %1341 = vmatpush1.msra.mxu0 0.0
    %1342 = vmatprep.subr.mxu0 0.0
    %1343 = vmatpush1.msra.mxu0 0.0
    %1344 = vmatprep.subr.mxu0 0.0
    %1345 = vmatpush1.msra.mxu0 0.0
    %1346 = vmatprep.subr.mxu0 0.0
    %1347 = vmatpush1.msra.mxu0 0.0
    %1348 = vmatprep.subr.mxu0 0.0
    %1349 = vmatpush1.msra.mxu0 0.0
    %1350 = vmatprep.subr.mxu0 0.0
    %1351 = vmatpush1.msra.mxu0 0.0
    %1352 = vmatprep.subr.mxu0 0.0
    %1353 = vmatpush1.msra.mxu0 0.0
    %1354 = vmatprep.subr.mxu0 0.0
    %1355 = vmatpush1.msra.mxu0 0.0
    %1356 = vmatprep.subr.mxu0 0.0
    %1357 = vmatpush1.msra.mxu0 0.0
    %1358 = vmatprep.subr.mxu0 0.0
    %1359 = vmatpush1.msra.mxu0 0.0
    %1360 = vmatprep.subr.mxu0 0.0
    %1361 = vmatpush1.msra.mxu0 0.0
    %1362 = vmatprep.subr.mxu0 0.0
    %1363 = vmatpush1.msra.mxu0 0.0
    %1364 = vmatprep.subr.mxu0 0.0
    %1365 = vmatpush1.msra.mxu0 0.0
    %1366 = vmatprep.subr.mxu0 0.0
    %1367 = vmatpush1.msra.mxu0 0.0
    %1368 = vmatprep.subr.mxu0 0.0
    %1369 = vmatpush1.msra.mxu0 0.0
    %1370 = vmatprep.subr.mxu0 0.0
    %1371 = vmatpush1.msra.mxu0 0.0
    %1372 = vmatprep.subr.mxu0 0.0
    %1373 = vmatpush1.msra.mxu0 0.0
    %1374 = vmatprep.subr.mxu0 0.0
    %1375 = vmatpush1.msra.mxu0 0.0
    %1376 = vmatprep.subr.mxu0 0.0
    %1377 = vmatpush1.msra.mxu0 0.0
    %1378 = vmatprep.subr.mxu0 0.0
    %1379 = vmatpush1.msra.mxu0 0.0
    %1380 = vmatprep.subr.mxu0 0.0
    %1381 = vmatpush1.msra.mxu0 0.0
    %1382 = vmatprep.subr.mxu0 0.0
    %1383 = vmatpush1.msra.mxu0 0.0
    %1384 = vmatprep.subr.mxu0 0.0
    %1385 = vmatpush1.msra.mxu0 0.0
    %1386 = vmatprep.subr.mxu0 0.0
    %1387 = vmatpush1.msra.mxu0 0.0
    %1388 = vmatprep.subr.mxu0 0.0
    %1389 = vmatpush1.msra.mxu0 0.0
    %1390 = vmatprep.subr.mxu0 0.0
    %1391 = vmatpush1.msra.mxu0 0.0
    %1392 = vmatprep.subr.mxu0 0.0
    %1393 = vmatpush1.msra.mxu0 0.0
    %1394 = vmatprep.mubr.f32.mxu0 0.0
    %1395 = vmatmul.mubr.f32.gmra.mrb[0].mxu0 %v1328
    %v1396 = vpop.f32.mrb[0].mxu0
    %v1397 = vadd.f32 0.0, %v1396
    %v1398 = vpop.f32.mrb[0].mxu0
    %1399 = vdwg.mxu0
    %1400 = vmatprep.subr.mxu0 0.0
    %1401 = vmatpush1.msra.mxu0 %v1324
    %1402 = vmatprep.subr.mxu0 0.0
    %1403 = vmatpush1.msra.mxu0 %v1325
    %1404 = vmatprep.subr.mxu0 0.0
    %1405 = vmatpush1.msra.mxu0 0.0
    %1406 = vmatprep.subr.mxu0 0.0
    %1407 = vmatpush1.msra.mxu0 0.0
    %1408 = vmatprep.subr.mxu0 0.0
    %1409 = vmatpush1.msra.mxu0 0.0
    %1410 = vmatprep.subr.mxu0 0.0
    %1411 = vmatpush1.msra.mxu0 0.0
    %1412 = vmatprep.subr.mxu0 0.0
    %1413 = vmatpush1.msra.mxu0 0.0
    %1414 = vmatprep.subr.mxu0 0.0
    %1415 = vmatpush1.msra.mxu0 0.0
    %1416 = vmatprep.subr.mxu0 0.0
    %1417 = vmatpush1.msra.mxu0 0.0
    %1418 = vmatprep.subr.mxu0 0.0
    %1419 = vmatpush1.msra.mxu0 0.0
    %1420 = vmatprep.subr.mxu0 0.0
    %1421 = vmatpush1.msra.mxu0 0.0
    %1422 = vmatprep.subr.mxu0 0.0
    %1423 = vmatpush1.msra.mxu0 0.0
    %1424 = vmatprep.subr.mxu0 0.0
    %1425 = vmatpush1.msra.mxu0 0.0
    %1426 = vmatprep.subr.mxu0 0.0
    %1427 = vmatpush1.msra.mxu0 0.0
    %1428 = vmatprep.subr.mxu0 0.0
    %1429 = vmatpush1.msra.mxu0 0.0
    %1430 = vmatprep.subr.mxu0 0.0
    %1431 = vmatpush1.msra.mxu0 0.0
    %1432 = vmatprep.subr.mxu0 0.0
    %1433 = vmatpush1.msra.mxu0 0.0
    %1434 = vmatprep.subr.mxu0 0.0
    %1435 = vmatpush1.msra.mxu0 0.0
    %1436 = vmatprep.subr.mxu0 0.0
    %1437 = vmatpush1.msra.mxu0 0.0
    %1438 = vmatprep.subr.mxu0 0.0
    %1439 = vmatpush1.msra.mxu0 0.0
    %1440 = vmatprep.subr.mxu0 0.0
    %1441 = vmatpush1.msra.mxu0 0.0
    %1442 = vmatprep.subr.mxu0 0.0
    %1443 = vmatpush1.msra.mxu0 0.0
    %1444 = vmatprep.subr.mxu0 0.0
    %1445 = vmatpush1.msra.mxu0 0.0
    %1446 = vmatprep.subr.mxu0 0.0
    %1447 = vmatpush1.msra.mxu0 0.0
    %1448 = vmatprep.subr.mxu0 0.0
    %1449 = vmatpush1.msra.mxu0 0.0
    %1450 = vmatprep.subr.mxu0 0.0
    %1451 = vmatpush1.msra.mxu0 0.0
    %1452 = vmatprep.subr.mxu0 0.0
    %1453 = vmatpush1.msra.mxu0 0.0
    %1454 = vmatprep.subr.mxu0 0.0
    %1455 = vmatpush1.msra.mxu0 0.0
    %1456 = vmatprep.subr.mxu0 0.0
    %1457 = vmatpush1.msra.mxu0 0.0
    %1458 = vmatprep.subr.mxu0 0.0
    %1459 = vmatpush1.msra.mxu0 0.0
    %1460 = vmatprep.subr.mxu0 0.0
    %1461 = vmatpush1.msra.mxu0 0.0
    %1462 = vmatprep.subr.mxu0 0.0
    %1463 = vmatpush1.msra.mxu0 0.0
    %1464 = vmatprep.mubr.f32.mxu0 0.0
    %1465 = vmatmul.mubr.f32.gmra.mrb[0].mxu0 %v1045
    %v1466 = vpop.f32.mrb[0].mxu0
    %v1467 = vadd.f32 %v1397, %v1466
    %v1468 = vpop.f32.mrb[0].mxu0
    %1469 = vdwg.mxu0
    %v1470 = vld [vmem:[#allocation9 + $0x148] sm:$0x1]
    %v1471 = vlaneseq
    %v1472 = vshrl.u32 %v1471, 7
    %v1473 = vsub.s32 0, %v1472
    %v1474 = vrot.slane %v1470, %v1473
    %v1475 = vadd.f32 %v1467, %v1474
    %v1476 = vmax.f32 %v1475, 0.0
    %s1477 = smul.u32 4, 8
    %s1478 = smul.u32 %s1477, 8
    %s1479 = sshll.u32 %s1478, 4
    %1480 = dma.done [#allocation3], %s1479
    %v1481 = vpack.c.bf16 %v1476, %v1476
    %v1482 = vld [vmem:[#allocation2] sm:$0xff]
    %v1483 = vld [vmem:[#allocation2 + $0x8] sm:$0xff]
    %v1484 = vld [vmem:[#allocation2 + $0x10] sm:$0xff]
    %v1485 = vld [vmem:[#allocation2 + $0x18] sm:$0xff]
    %v1486 = vld [vmem:[#allocation2 + $0x20] sm:$0xff]
    %v1487 = vld [vmem:[#allocation2 + $0x28] sm:$0xff]
    %v1488 = vld [vmem:[#allocation2 + $0x30] sm:$0xff]
    %v1489 = vld [vmem:[#allocation2 + $0x38] sm:$0xff]
    %v1490 = vld [vmem:[#allocation2 + $0x40] sm:$0xff]
    %v1491 = vld [vmem:[#allocation2 + $0x48] sm:$0xff]
    %v1492 = vld [vmem:[#allocation2 + $0x50] sm:$0xff]
    %v1493 = vld [vmem:[#allocation2 + $0x58] sm:$0xff]
    %v1494 = vld [vmem:[#allocation2 + $0x60] sm:$0xff]
    %v1495 = vld [vmem:[#allocation2 + $0x68] sm:$0xff]
    %v1496 = vld [vmem:[#allocation2 + $0x70] sm:$0xff]
    %v1497 = vld [vmem:[#allocation2 + $0x78] sm:$0xff]
    %v1498 = vld [vmem:[#allocation2 + $0x80] sm:$0xff]
    %v1499 = vld [vmem:[#allocation2 + $0x88] sm:$0xff]
    %v1500 = vld [vmem:[#allocation2 + $0x90] sm:$0xff]
    %v1501 = vld [vmem:[#allocation2 + $0x98] sm:$0xff]
    %v1502 = vld [vmem:[#allocation2 + $0xa0] sm:$0xff]
    %v1503 = vld [vmem:[#allocation2 + $0xa8] sm:$0xff]
    %v1504 = vld [vmem:[#allocation2 + $0xb0] sm:$0xff]
    %v1505 = vld [vmem:[#allocation2 + $0xb8] sm:$0xff]
    %v1506 = vld [vmem:[#allocation2 + $0xc0] sm:$0xff]
    %v1507 = vld [vmem:[#allocation2 + $0xc8] sm:$0xff]
    %v1508 = vld [vmem:[#allocation2 + $0xd0] sm:$0xff]
    %v1509 = vld [vmem:[#allocation2 + $0xd8] sm:$0xff]
    %v1510 = vld [vmem:[#allocation2 + $0xe0] sm:$0xff]
    %v1511 = vld [vmem:[#allocation2 + $0xe8] sm:$0xff]
    %v1512 = vld [vmem:[#allocation2 + $0xf0] sm:$0xff]
    %v1513 = vld [vmem:[#allocation2 + $0xf8] sm:$0xff]
    %v1514 = vld [vmem:[%s4] sm:$0xff]
    %v1516 = vlaneseq
    %v1517 = vshrl.u32 %v1516, 7
    %v1518 = vsub.s32 0, %v1517
    %v1519 = vrot.slane %v1514, %v1518
    %v1520 = vlaneseq
    %v1521 = vshrl.u32 %v1520, 7
    %v1522 = vsub.s32 1, %v1521
    %v1523 = vrot.slane %v1514, %v1522
    %v1524 = vlaneseq
    %v1525 = vshrl.u32 %v1524, 7
    %v1526 = vsub.s32 2, %v1525
    %v1527 = vrot.slane %v1514, %v1526
    %v1528 = vlaneseq
    %v1529 = vshrl.u32 %v1528, 7
    %v1530 = vsub.s32 3, %v1529
    %v1531 = vrot.slane %v1514, %v1530
    %v1532 = vlaneseq
    %v1533 = vshrl.u32 %v1532, 7
    %v1534 = vsub.s32 4, %v1533
    %v1535 = vrot.slane %v1514, %v1534
    %v1536 = vlaneseq
    %v1537 = vshrl.u32 %v1536, 7
    %v1538 = vsub.s32 5, %v1537
    %v1539 = vrot.slane %v1514, %v1538
    %v1540 = vlaneseq
    %v1541 = vshrl.u32 %v1540, 7
    %v1542 = vsub.s32 6, %v1541
    %v1543 = vrot.slane %v1514, %v1542
    %v1544 = vlaneseq
    %v1545 = vshrl.u32 %v1544, 7
    %v1546 = vsub.s32 7, %v1545
    %v1547 = vrot.slane %v1514, %v1546
    %v1557 = vsel %vm848, %v1481, 0
    %1559 = vmatprep.subr.bf16.mxu0 %v1483
    %1560 = vmatpush1.bf16.msra.mxu0 %v1482
    %1561 = vmatprep.subr.bf16.mxu0 %v1491
    %1562 = vmatpush1.bf16.msra.mxu0 %v1490
    %1563 = vmatprep.subr.bf16.mxu0 %v1499
    %1564 = vmatpush1.bf16.msra.mxu0 %v1498
    %1565 = vmatprep.subr.bf16.mxu0 %v1507
    %1566 = vmatpush1.bf16.msra.mxu0 %v1506
    %1567 = vmatprep.subr.bf16.mxu0 0
    %1568 = vmatpush1.bf16.msra.mxu0 0
    %1569 = vmatprep.subr.bf16.mxu0 0
    %1570 = vmatpush1.bf16.msra.mxu0 0
    %1571 = vmatprep.subr.bf16.mxu0 0
    %1572 = vmatpush1.bf16.msra.mxu0 0
    %1573 = vmatprep.subr.bf16.mxu0 0
    %1574 = vmatpush1.bf16.msra.mxu0 0
    %1575 = vmatprep.subr.bf16.mxu0 0
    %1576 = vmatpush1.bf16.msra.mxu0 0
    %1577 = vmatprep.subr.bf16.mxu0 0
    %1578 = vmatpush1.bf16.msra.mxu0 0
    %1579 = vmatprep.subr.bf16.mxu0 0
    %1580 = vmatpush1.bf16.msra.mxu0 0
    %1581 = vmatprep.subr.bf16.mxu0 0
    %1582 = vmatpush1.bf16.msra.mxu0 0
    %1583 = vmatprep.subr.bf16.mxu0 0
    %1584 = vmatpush1.bf16.msra.mxu0 0
    %1585 = vmatprep.subr.bf16.mxu0 0
    %1586 = vmatpush1.bf16.msra.mxu0 0
    %1587 = vmatprep.subr.bf16.mxu0 0
    %1588 = vmatpush1.bf16.msra.mxu0 0
    %1589 = vmatprep.subr.bf16.mxu0 0
    %1590 = vmatpush1.bf16.msra.mxu0 0
    %1591 = vmatprep.mubr.bf16.mxu0 0
    %1592 = vmatmul.mubr.bf16.gmra.mrb[0].mxu0 %v1557
    %v1593 = vpop.f32.mrb[0].mxu0
    %v1594 = vadd.f32 %v1519, %v1593
    %v1595 = vpop.f32.mrb[0].mxu0
    %v1596 = vadd.f32 %v1523, %v1595
    %v1597 = vpop.f32.mrb[0].mxu0
    %v1598 = vpop.f32.mrb[0].mxu0
    %1599 = vdwg.mxu0
    %1600 = vmatprep.subr.bf16.mxu0 %v1485
    %1601 = vmatpush1.bf16.msra.mxu0 %v1484
    %1602 = vmatprep.subr.bf16.mxu0 %v1493
    %1603 = vmatpush1.bf16.msra.mxu0 %v1492
    %1604 = vmatprep.subr.bf16.mxu0 %v1501
    %1605 = vmatpush1.bf16.msra.mxu0 %v1500
    %1606 = vmatprep.subr.bf16.mxu0 %v1509
    %1607 = vmatpush1.bf16.msra.mxu0 %v1508
    %1608 = vmatprep.subr.bf16.mxu0 0
    %1609 = vmatpush1.bf16.msra.mxu0 0
    %1610 = vmatprep.subr.bf16.mxu0 0
    %1611 = vmatpush1.bf16.msra.mxu0 0
    %1612 = vmatprep.subr.bf16.mxu0 0
    %1613 = vmatpush1.bf16.msra.mxu0 0
    %1614 = vmatprep.subr.bf16.mxu0 0
    %1615 = vmatpush1.bf16.msra.mxu0 0
    %1616 = vmatprep.subr.bf16.mxu0 0
    %1617 = vmatpush1.bf16.msra.mxu0 0
    %1618 = vmatprep.subr.bf16.mxu0 0
    %1619 = vmatpush1.bf16.msra.mxu0 0
    %1620 = vmatprep.subr.bf16.mxu0 0
    %1621 = vmatpush1.bf16.msra.mxu0 0
    %1622 = vmatprep.subr.bf16.mxu0 0
    %1623 = vmatpush1.bf16.msra.mxu0 0
    %1624 = vmatprep.subr.bf16.mxu0 0
    %1625 = vmatpush1.bf16.msra.mxu0 0
    %1626 = vmatprep.subr.bf16.mxu0 0
    %1627 = vmatpush1.bf16.msra.mxu0 0
    %1628 = vmatprep.subr.bf16.mxu0 0
    %1629 = vmatpush1.bf16.msra.mxu0 0
    %1630 = vmatprep.subr.bf16.mxu0 0
    %1631 = vmatpush1.bf16.msra.mxu0 0
    %1632 = vmatprep.mubr.bf16.mxu0 0
    %1633 = vmatmul.mubr.bf16.gmra.mrb[0].mxu0 %v1557
    %v1634 = vpop.f32.mrb[0].mxu0
    %v1635 = vadd.f32 %v1527, %v1634
    %v1636 = vpop.f32.mrb[0].mxu0
    %v1637 = vadd.f32 %v1531, %v1636
    %v1638 = vpop.f32.mrb[0].mxu0
    %v1639 = vpop.f32.mrb[0].mxu0
    %1640 = vdwg.mxu0
    %1641 = vmatprep.subr.bf16.mxu0 %v1487
    %1642 = vmatpush1.bf16.msra.mxu0 %v1486
    %1643 = vmatprep.subr.bf16.mxu0 %v1495
    %1644 = vmatpush1.bf16.msra.mxu0 %v1494
    %1645 = vmatprep.subr.bf16.mxu0 %v1503
    %1646 = vmatpush1.bf16.msra.mxu0 %v1502
    %1647 = vmatprep.subr.bf16.mxu0 %v1511
    %1648 = vmatpush1.bf16.msra.mxu0 %v1510
    %1649 = vmatprep.subr.bf16.mxu0 0
    %1650 = vmatpush1.bf16.msra.mxu0 0
    %1651 = vmatprep.subr.bf16.mxu0 0
    %1652 = vmatpush1.bf16.msra.mxu0 0
    %1653 = vmatprep.subr.bf16.mxu0 0
    %1654 = vmatpush1.bf16.msra.mxu0 0
    %1655 = vmatprep.subr.bf16.mxu0 0
    %1656 = vmatpush1.bf16.msra.mxu0 0
    %1657 = vmatprep.subr.bf16.mxu0 0
    %1658 = vmatpush1.bf16.msra.mxu0 0
    %1659 = vmatprep.subr.bf16.mxu0 0
    %1660 = vmatpush1.bf16.msra.mxu0 0
    %1661 = vmatprep.subr.bf16.mxu0 0
    %1662 = vmatpush1.bf16.msra.mxu0 0
    %1663 = vmatprep.subr.bf16.mxu0 0
    %1664 = vmatpush1.bf16.msra.mxu0 0
    %1665 = vmatprep.subr.bf16.mxu0 0
    %1666 = vmatpush1.bf16.msra.mxu0 0
    %1667 = vmatprep.subr.bf16.mxu0 0
    %1668 = vmatpush1.bf16.msra.mxu0 0
    %1669 = vmatprep.subr.bf16.mxu0 0
    %1670 = vmatpush1.bf16.msra.mxu0 0
    %1671 = vmatprep.subr.bf16.mxu0 0
    %1672 = vmatpush1.bf16.msra.mxu0 0
    %1673 = vmatprep.mubr.bf16.mxu0 0
    %1674 = vmatmul.mubr.bf16.gmra.mrb[0].mxu0 %v1557
    %v1675 = vpop.f32.mrb[0].mxu0
    %v1676 = vadd.f32 %v1535, %v1675
    %v1677 = vpop.f32.mrb[0].mxu0
    %v1678 = vadd.f32 %v1539, %v1677
    %v1679 = vpop.f32.mrb[0].mxu0
    %v1680 = vpop.f32.mrb[0].mxu0
    %1681 = vdwg.mxu0
    %1682 = vmatprep.subr.bf16.mxu0 %v1489
    %1683 = vmatpush1.bf16.msra.mxu0 %v1488
    %1684 = vmatprep.subr.bf16.mxu0 %v1497
    %1685 = vmatpush1.bf16.msra.mxu0 %v1496
    %1686 = vmatprep.subr.bf16.mxu0 %v1505
    %1687 = vmatpush1.bf16.msra.mxu0 %v1504
    %1688 = vmatprep.subr.bf16.mxu0 %v1513
    %1689 = vmatpush1.bf16.msra.mxu0 %v1512
    %1690 = vmatprep.subr.bf16.mxu0 0
    %1691 = vmatpush1.bf16.msra.mxu0 0
    %1692 = vmatprep.subr.bf16.mxu0 0
    %1693 = vmatpush1.bf16.msra.mxu0 0
    %1694 = vmatprep.subr.bf16.mxu0 0
    %1695 = vmatpush1.bf16.msra.mxu0 0
    %1696 = vmatprep.subr.bf16.mxu0 0
    %1697 = vmatpush1.bf16.msra.mxu0 0
    %1698 = vmatprep.subr.bf16.mxu0 0
    %1699 = vmatpush1.bf16.msra.mxu0 0
    %1700 = vmatprep.subr.bf16.mxu0 0
    %1701 = vmatpush1.bf16.msra.mxu0 0
    %1702 = vmatprep.subr.bf16.mxu0 0
    %1703 = vmatpush1.bf16.msra.mxu0 0
    %1704 = vmatprep.subr.bf16.mxu0 0
    %1705 = vmatpush1.bf16.msra.mxu0 0
    %1706 = vmatprep.subr.bf16.mxu0 0
    %1707 = vmatpush1.bf16.msra.mxu0 0
    %1708 = vmatprep.subr.bf16.mxu0 0
    %1709 = vmatpush1.bf16.msra.mxu0 0
    %1710 = vmatprep.subr.bf16.mxu0 0
    %1711 = vmatpush1.bf16.msra.mxu0 0
    %1712 = vmatprep.subr.bf16.mxu0 0
    %1713 = vmatpush1.bf16.msra.mxu0 0
    %1714 = vmatprep.mubr.bf16.mxu0 0
    %1715 = vmatmul.mubr.bf16.gmra.mrb[0].mxu0 %v1557
    %v1716 = vpop.f32.mrb[0].mxu0
    %v1717 = vadd.f32 %v1543, %v1716
    %v1718 = vpop.f32.mrb[0].mxu0
    %v1719 = vadd.f32 %v1547, %v1718
    %v1720 = vpop.f32.mrb[0].mxu0
    %v1721 = vpop.f32.mrb[0].mxu0
    %1722 = vdwg.mxu0
    %v1723 = vxor.u32 %v1594, 2147483648
    %v1724 = vxor.u32 %v1596, 2147483648
    %v1725 = vxor.u32 %v1635, 2147483648
    %v1726 = vxor.u32 %v1637, 2147483648
    %v1727 = vxor.u32 %v1676, 2147483648
    %v1728 = vxor.u32 %v1678, 2147483648
    %v1729 = vxor.u32 %v1717, 2147483648
    %v1730 = vxor.u32 %v1719, 2147483648
    %v1731 = vmul.f32 %v1723, 1.442695
    %v1732 = vpow.pop %v1731
    %v1733 = vmul.f32 %v1724, 1.442695
    %v1734 = vpow.pop %v1733
    %v1735 = vmul.f32 %v1725, 1.442695
    %v1736 = vpow.pop %v1735
    %v1737 = vmul.f32 %v1726, 1.442695
    %v1738 = vpow.pop %v1737
    %v1739 = vmul.f32 %v1727, 1.442695
    %v1740 = vpow.pop %v1739
    %v1741 = vmul.f32 %v1728, 1.442695
    %v1742 = vpow.pop %v1741
    %v1743 = vmul.f32 %v1729, 1.442695
    %v1744 = vpow.pop %v1743
    %v1745 = vmul.f32 %v1730, 1.442695
    %v1746 = vpow.pop %v1745
    %v1747 = vadd.f32 %v1732, 1.0
    %v1748 = vadd.f32 %v1734, 1.0
    %v1749 = vadd.f32 %v1736, 1.0
    %v1750 = vadd.f32 %v1738, 1.0
    %v1751 = vadd.f32 %v1740, 1.0
    %v1752 = vadd.f32 %v1742, 1.0
    %v1753 = vadd.f32 %v1744, 1.0
    %v1754 = vadd.f32 %v1746, 1.0
    %v1755 = vrcp.pop %v1747
    %v1756 = vmul.f32 1.0, %v1755
    %v1757 = vrcp.pop %v1748
    %v1758 = vmul.f32 1.0, %v1757
    %v1759 = vrcp.pop %v1749
    %v1760 = vmul.f32 1.0, %v1759
    %v1761 = vrcp.pop %v1750
    %v1762 = vmul.f32 1.0, %v1761
    %v1763 = vrcp.pop %v1751
    %v1764 = vmul.f32 1.0, %v1763
    %v1765 = vrcp.pop %v1752
    %v1766 = vmul.f32 1.0, %v1765
    %v1767 = vrcp.pop %v1753
    %v1768 = vmul.f32 1.0, %v1767
    %v1769 = vrcp.pop %v1754
    %v1770 = vmul.f32 1.0, %v1769
    %v1779 = vcombine.low %v1756, %v1758
    %v1780 = vcombine.low %v1760, %v1762
    %v1782 = vunpack.c.l.s4 1983009808
    %v1783 = vunpack.c.0.s8 %v1782
    %v1784 = vlaneseq
    %v1785 = vshrl.u32 %v1784, 7
    %v1786 = vsub.s32 %v1783, %v1785
    %v1787 = vrot.slane %v1779, %v1786
    %v1789 = vunpack.c.l.s4 1983009808
    %v1790 = vunpack.c.0.s8 %v1789
    %v1791 = vlaneseq
    %v1792 = vshrl.u32 %v1791, 7
    %v1793 = vsub.s32 %v1790, %v1792
    %v1794 = vrot.slane %v1780, %v1793
    %v1795 = vcombine.low %v1787, %v1794
    %v1796 = vcombine.low %v1764, %v1766
    %v1797 = vcombine.low %v1768, %v1770
    %v1799 = vunpack.c.l.s4 1983009808
    %v1800 = vunpack.c.0.s8 %v1799
    %v1801 = vlaneseq
    %v1802 = vshrl.u32 %v1801, 7
    %v1803 = vsub.s32 %v1800, %v1802
    %v1804 = vrot.slane %v1796, %v1803
    %v1806 = vunpack.c.l.s4 1983009808
    %v1807 = vunpack.c.0.s8 %v1806
    %v1808 = vlaneseq
    %v1809 = vshrl.u32 %v1808, 7
    %v1810 = vsub.s32 %v1807, %v1809
    %v1811 = vrot.slane %v1797, %v1810
    %v1812 = vcombine.low %v1804, %v1811
    %1815 = vst [vmem:[#allocation10] sm:$0xff] %v1795
    %1816 = vst [vmem:[#allocation10 + $0x8] sm:$0xff] %v1812
    // Predicated region
    $region34: #{tpu_custom_call.1} parent=1 // pred_check
      _
    $region35: #{tpu_custom_call.1} parent=1 // pred_check_branch
      %1818 = sbr.rel (0) target = $region37
    $region36: #{tpu_custom_call.1} parent=1 // pred_region
      %s1820 = ssub.s32 256, 256
      %1821 = vsyncadd [#allocation6], %s1820
      %s1823 = sshll.u32 [#allocation10], 4
      %s1824 = int_to_ptr.vmem [resolvable:$true] %s1823
      %1826 = dma.vmem_to_hbm [thread:$0]  %s1824, 256, %s6, [#allocation6]
    $region37: #{tpu_custom_call.1} parent=1 // pred_fallthru
      _
    // Predicated region
    $region38: #{tpu_custom_call.1} parent=1 // pred_check
      _
    $region39: #{tpu_custom_call.1} parent=1 // pred_check_branch
      %1828 = sbr.rel (0) target = $region41
    $region40: #{tpu_custom_call.1} parent=1 // pred_region
      %s1830 = ssub.s32 32, 32
      %1831 = vsyncadd [#allocation12], %s1830
      %s1833 = sshll.u32 [#allocation11], 4
      %s1834 = int_to_ptr.vmem [resolvable:$true] %s1833
      %1836 = dma.vmem_to_hbm [thread:$0]  %s1834, 32, %s7, [#allocation12]
    $region41: #{tpu_custom_call.1} parent=1 // pred_fallthru
      _
    // Predicated region
    $region42: #{tpu_custom_call.1} parent=1 // pred_check
      _
    $region43: #{tpu_custom_call.1} parent=1 // pred_check_branch
      %1838 = sbr.rel (0) target = $region45
    $region44: #{tpu_custom_call.1} parent=1 // pred_region
      %1839 = dma.done [#allocation6], 256
    $region45: #{tpu_custom_call.1} parent=1 // pred_fallthru
      _
    // Predicated region
    $region46: #{tpu_custom_call.1} parent=1 // pred_check
      _
    $region47: #{tpu_custom_call.1} parent=1 // pred_check_branch
      %1841 = sbr.rel (0) target = $region49
    $region48: #{tpu_custom_call.1} parent=1 // pred_region
      %1842 = dma.done [#allocation12], 32
    $region49: #{tpu_custom_call.1} parent=1 // pred_fallthru
      _
    %1843 = vsyncpa [#allocation5], 1
    %1844 = vsyncpa [#allocation8], 1
    %1845 = vsyncpa [#allocation6], 1
    %1846 = vsyncpa [#allocation12], 1
  %1847 = vsyncmov [#allocation3]
  %s1848 = vpop.sfrf %1847
  %p1849 = scmp.eq.s32.totalorder %s1848, 0
  %p1850 = pneg %p1849
  %1852 = shalt.err (%p1850)

</llo_original>
